<compile_context>
chip_gen: v7x
topology: tpu7x:2x2x1
jax: 0.10.0
libtpu: 0.0.40
codegen_flags: <defaults>
</compile_context>

<pallas_src>
import functools

import jax
import jax.numpy as jnp
from jax.experimental import pallas as pl
from jax.experimental.pallas import tpu as pltpu


def _round_up(x, m):
    return ((x + m - 1) // m) * m


def _cdiv(a, b):
    return (a + b - 1) // b


def _pick_vmem_limit():
    cap = 64 * 1024 * 1024            # conservative fallback (v7x-sized VMEM)
    try:
        cap = int(pltpu.get_tpu_info().vmem_capacity_bytes)
    except Exception:
        pass
    # ~96 MiB on 128-MiB parts (v5e/v6e), ~48 MiB on 64-MiB parts (v7x).
    return int(min(cap * 3 // 4, 100 * 1024 * 1024))


# ----------------------------------------------------------------------------
# One-time parameter preparation (hoisted out of the per-call forward).
# ----------------------------------------------------------------------------
def prepare_params(params, *, input_dim, ff_dim, gate_count, output_size,
                   gate_scale=0.9, compute_dtype=jnp.bfloat16):
    w1, b1, w2, b2, w3 = params
    two_d = 2 * ff_dim

    k_pad = _round_up(input_dim, 128)
    c_pad = _round_up(two_d, 128)
    f_pad = _round_up(ff_dim, 128)
    o_pad = _round_up(output_size, 128)

    # l1 weight -> chunk-major (G+1, K, 2D). Chunk G is the always-on "common"
    # chunk (the reference appends the ones column last); chunks 0..G-1 are gated.
    w1_chunks = w1.reshape(input_dim, gate_count + 1, two_d).transpose(1, 0, 2)
    b1_chunks = b1.reshape(gate_count + 1, two_d)

    w1_gate = jnp.zeros((gate_count, k_pad, c_pad), compute_dtype)
    w1_gate = w1_gate.at[:, :input_dim, :two_d].set(
        w1_chunks[:gate_count].astype(compute_dtype))
    w1_common = jnp.zeros((k_pad, c_pad), compute_dtype)
    w1_common = w1_common.at[:input_dim, :two_d].set(
        w1_chunks[gate_count].astype(compute_dtype))

    b1_gate = jnp.zeros((gate_count, 1, c_pad), jnp.float32)
    b1_gate = b1_gate.at[:, 0, :two_d].set(b1_chunks[:gate_count])
    b1_common = jnp.zeros((1, c_pad), jnp.float32)
    b1_common = b1_common.at[0, :two_d].set(b1_chunks[gate_count])

    w2_p = jnp.zeros((c_pad, f_pad), compute_dtype)
    w2_p = w2_p.at[:two_d, :ff_dim].set(w2.astype(compute_dtype))
    b2_p = jnp.zeros((1, f_pad), jnp.float32).at[0, :ff_dim].set(b2.reshape(-1))
    w3_p = jnp.zeros((f_pad, o_pad), compute_dtype)
    w3_p = w3_p.at[:ff_dim, :output_size].set(w3.astype(compute_dtype))

    return dict(
        w1_common=w1_common, b1_common=b1_common,
        w1_gate=w1_gate, b1_gate=b1_gate,
        w2=w2_p, b2=b2_p, w3=w3_p,
        input_dim=input_dim, ff_dim=ff_dim, gate_count=gate_count,
        output_size=output_size, gate_scale=gate_scale,
        compute_dtype=compute_dtype,
        k_pad=k_pad, c_pad=c_pad, f_pad=f_pad, o_pad=o_pad)


# ----------------------------------------------------------------------------
# Kernel: one gate-homogeneous batch tile per grid step.
# ----------------------------------------------------------------------------
def _gated_mlp_kernel(tile_gate_ref,                      # scalar prefetch (SMEM);
                      x_ref, w1c_ref, b1c_ref,            # gate already applied via
                      w1g_ref, b1g_ref, w2_ref, b2_ref,   # the index_maps
                      w3_ref, o_ref, *, gate_scale, compute_dtype):
    del tile_gate_ref
    x = x_ref[...]                                        # (TN, K_pad) compute dtype

    # l1: always-on common chunk + this tile's own gate chunk (scaled). f32 accum,
    # f32 bias/ReLU/combine (keeps the VPU path f32 on v5e).
    common = jnp.dot(x, w1c_ref[...],
                     preferred_element_type=jnp.float32) + b1c_ref[...]
    gated = jnp.dot(x, w1g_ref[0],
                    preferred_element_type=jnp.float32) + b1g_ref[0]
    hidden = jnp.maximum(common, 0.0) + gate_scale * jnp.maximum(gated, 0.0)

    # l2 + ReLU : (TN, C_pad) @ (C_pad, F_pad), bf16 into the MXU, f32 out.
    h2 = jnp.maximum(
        jnp.dot(hidden.astype(compute_dtype), w2_ref[...],
                preferred_element_type=jnp.float32) + b2_ref[...], 0.0)

    # l3 (no bias) : (TN, F_pad) @ (F_pad, O_pad)
    o_ref[...] = jnp.dot(h2.astype(compute_dtype), w3_ref[...],
                         preferred_element_type=jnp.float32)


def _run_pallas(tile_gate, x_grouped, prep, *, tile_n, max_tiles,
                single_buffer_weights):
    cdt = prep["compute_dtype"]
    k_pad, c_pad = prep["k_pad"], prep["c_pad"]
    f_pad, o_pad = prep["f_pad"], prep["o_pad"]

    def wspec(shape, index_map):
        # Constant-index weights: single-buffer on request (halves their VMEM
        # footprint — important on v7x's 64-MiB VMEM).
        if single_buffer_weights:
            return pl.BlockSpec(shape, index_map, pipeline_mode=pl.Buffered(1))
        return pl.BlockSpec(shape, index_map)

    kernel = functools.partial(_gated_mlp_kernel,
                               gate_scale=prep["gate_scale"],
                               compute_dtype=cdt)

    grid_spec = pltpu.PrefetchScalarGridSpec(
        num_scalar_prefetch=1,
        grid=(max_tiles,),
        in_specs=[
            # gate-homogeneous batch tile
            pl.BlockSpec((tile_n, k_pad), lambda i, tg: (i, 0)),
            # VMEM-resident common l1 chunk + bias
            wspec((k_pad, c_pad), lambda i, tg: (0, 0)),
            wspec((1, c_pad), lambda i, tg: (0, 0)),
            # per-tile gate chunk: data-dependent block index from SMEM prefetch
            # (default double-buffering so its DMA overlaps when the gate changes)
            pl.BlockSpec((1, k_pad, c_pad), lambda i, tg: (tg[i], 0, 0)),
            pl.BlockSpec((1, 1, c_pad), lambda i, tg: (tg[i], 0, 0)),
            # VMEM-resident l2 / l3 params
            wspec((c_pad, f_pad), lambda i, tg: (0, 0)),
            wspec((1, f_pad), lambda i, tg: (0, 0)),
            wspec((f_pad, o_pad), lambda i, tg: (0, 0)),
        ],
        out_specs=pl.BlockSpec((tile_n, o_pad), lambda i, tg: (i, 0)),
    )

    return pl.pallas_call(
        kernel,
        grid_spec=grid_spec,
        out_shape=jax.ShapeDtypeStruct((max_tiles * tile_n, o_pad), jnp.float32),
        compiler_params=pltpu.CompilerParams(
            dimension_semantics=("parallel",),
            vmem_limit_bytes=_pick_vmem_limit()),
    )(tile_gate, x_grouped,
      prep["w1_common"], prep["b1_common"],
      prep["w1_gate"], prep["b1_gate"],
      prep["w2"], prep["b2"], prep["w3"])


def _group_rows_by_gate(gate_ids, tile_n, gate_count, max_tiles):
    """Bucket rows by gate id into gate-homogeneous, tile_n-aligned groups."""
    gid = gate_ids.reshape(-1).astype(jnp.int32)                  # (n,)
    onehot = jax.nn.one_hot(gid, gate_count, dtype=jnp.int32)     # (n, G)
    counts = jnp.sum(onehot, axis=0)                              # (G,)
    tiles_per_gate = (counts + tile_n - 1) // tile_n              # (G,)
    cum_tiles = jnp.cumsum(tiles_per_gate)                        # (G,)
    tile_start = jnp.concatenate(
        [jnp.zeros((1,), jnp.int32), cum_tiles[:-1].astype(jnp.int32)])
    row_start = tile_start * tile_n                               # (G,)
    # stable rank of each row within its own gate group
    rank = jnp.sum((jnp.cumsum(onehot, axis=0) - 1) * onehot, axis=1)
    dest = row_start[gid] + rank                                  # (n,) dest rows
    # gate owning each tile; trailing padding tiles are clamped (their rows are
    # all-zero and their outputs are discarded by the final gather)
    tile_idx = jnp.arange(max_tiles, dtype=jnp.int32)
    tile_gate = jnp.searchsorted(cum_tiles, tile_idx, side="right")
    tile_gate = jnp.minimum(tile_gate, gate_count - 1).astype(jnp.int32)
    return dest, tile_gate


def gated_mlp_forward(x, gate_ids, prep, *, tile_n=256, single_buffer_weights=True):
    """x: (N, input_dim) f32, gate_ids: (N, 1) int. `prep` from prepare_params()."""
    n = x.shape[0]
    gate_count = prep["gate_count"]
    cdt = prep["compute_dtype"]
    input_dim = prep["input_dim"]
    k_pad = prep["k_pad"]
    output_size = prep["output_size"]

    # Batch tile: multiple of 16 (bf16 sublane packing), clamped for tiny batches.
    # On v6e/v5e sweep tile_n up to 512+ when N is large; keep at/below 256 on v7x.
    tile_n = max(16, min(int(tile_n), _round_up(n, 16)))
    tile_n = _round_up(tile_n, 16)

    # Static upper bound on tile count: sum_g ceil(c_g/T) <= ceil(n/T) + G - 1.
    max_tiles = _cdiv(n, tile_n) + gate_count - 1
    rows = max_tiles * tile_n

    dest, tile_gate = _group_rows_by_gate(gate_ids, tile_n, gate_count, max_tiles)

    # Scatter rows (cast to compute dtype, lane-padded) into the grouped buffer.
    x_grouped = jnp.zeros((rows, k_pad), cdt).at[dest, :input_dim].set(x.astype(cdt))

    if single_buffer_weights:
        try:
            out_grouped = jax.block_until_ready(
                _run_pallas(tile_gate, x_grouped, prep, tile_n=tile_n,
                            max_tiles=max_tiles, single_buffer_weights=True))
        except Exception:
            # Installed Pallas may not support Buffered(1) on the top-level grid.
            out_grouped = _run_pallas(tile_gate, x_grouped, prep, tile_n=tile_n,
                                      max_tiles=max_tiles,
                                      single_buffer_weights=False)
    else:
        out_grouped = _run_pallas(tile_gate, x_grouped, prep, tile_n=tile_n,
                                  max_tiles=max_tiles, single_buffer_weights=False)

    # Gather rows back to original order and drop lane padding.
    return out_grouped[dest][:, :output_size]


# ----------------------------------------------------------------------------
# Reference + demo
# ----------------------------------------------------------------------------
def init_params(key, input_dim, ff_dim, gate_count, output_size):
    k1, k2, k3, k4, k5 = jax.random.split(key, 5)
    l1_out = 2 * (1 + gate_count) * ff_dim
    w1 = jax.random.normal(k1, (input_dim, l1_out), jnp.float32) * 0.05
    b1 = jax.random.normal(k2, (1, l1_out), jnp.float32) * 0.05
    w2 = jax.random.normal(k3, (2 * ff_dim, ff_dim), jnp.float32) * 0.05
    b2 = jax.random.normal(k4, (1, ff_dim), jnp.float32) * 0.05
    w3 = jax.random.normal(k5, (ff_dim, output_size), jnp.float32) * 0.05
    return (w1, b1, w2, b2, w3)


def reference_forward(x, gate_ids, params, *, gate_count, ff_dim, gate_scale=0.9):
    """Pure-JAX reference mirroring the PyTorch module exactly."""
    w1, b1, w2, b2, w3 = params
    n = x.shape[0]
    out = jnp.maximum(x @ w1 + b1, 0.0)
    mask_ = jax.nn.one_hot(gate_ids[:, 0], gate_count)                   # (N, G)
    scaled = jnp.concatenate(
        [mask_ * gate_scale, jnp.ones((n, 1), jnp.float32)], axis=1)     # (N, G+1)
    mask = jnp.repeat(scaled[:, :, None], 2 * ff_dim, axis=2).reshape(n, -1)
    out = out * mask
    out = out.reshape(n, 1 + gate_count, 2 * ff_dim).sum(axis=1)
    out = jnp.maximum(out @ w2 + b2, 0.0)
    return out @ w3


if __name__ == "__main__":
    N = 8
    INPUT_DIM = 16
    FF_DIM = 32          # D
    GATE_COUNT = 3       # G
    OUTPUT_SIZE = 10

    key = jax.random.PRNGKey(0)
    kx, kg, kp = jax.random.split(key, 3)

    x = jax.random.normal(kx, (N, INPUT_DIM), jnp.float32)
    gate_ids = jax.random.randint(kg, (N, 1), 0, GATE_COUNT, jnp.int32)
    params = init_params(kp, INPUT_DIM, FF_DIM, GATE_COUNT, OUTPUT_SIZE)

    # Host-side equivalent of `assert torch.max(gate_ids) < self.G`.
    assert int(jnp.max(gate_ids)) < GATE_COUNT

    ref = reference_forward(x, gate_ids, params,
                            gate_count=GATE_COUNT, ff_dim=FF_DIM)

    # 1) f32 debug path: matches the f32 reference tightly.
    prep_f32 = prepare_params(params, input_dim=INPUT_DIM, ff_dim=FF_DIM,
                              gate_count=GATE_COUNT, output_size=OUTPUT_SIZE,
                              compute_dtype=jnp.float32)
    out_f32 = jax.block_until_ready(gated_mlp_forward(x, gate_ids, prep_f32))
    assert out_f32.shape == (N, OUTPUT_SIZE)
    assert jnp.allclose(out_f32, ref, atol=1e-5, rtol=1e-5)

    # 2) default bf16 MXU path: looser tolerance (expected precision, not a bug).
    prep_bf16 = prepare_params(params, input_dim=INPUT_DIM, ff_dim=FF_DIM,
                               gate_count=GATE_COUNT, output_size=OUTPUT_SIZE)
    out_bf16 = jax.block_until_ready(gated_mlp_forward(x, gate_ids, prep_bf16))
    assert out_bf16.shape == (N, OUTPUT_SIZE)
    assert jnp.allclose(out_bf16, ref, atol=1e-2, rtol=5e-2)

    print("KERNEL_OK")
</pallas_src>

<mosaic_0001>
module attributes {stable_mosaic.version = 11 : i64} {
  func.func @_gated_mlp_kernel(%arg0: i32, %arg1: memref<3xi32, #tpu.memory_space<smem>>, %arg2: memref<16x128xf32, #tpu.memory_space<vmem>>, %arg3: memref<128x128xf32, #tpu.memory_space<vmem>>, %arg4: memref<1x128xf32, #tpu.memory_space<vmem>>, %arg5: memref<1x128x128xf32, #tpu.memory_space<vmem>>, %arg6: memref<1x1x128xf32, #tpu.memory_space<vmem>>, %arg7: memref<128x128xf32, #tpu.memory_space<vmem>>, %arg8: memref<1x128xf32, #tpu.memory_space<vmem>>, %arg9: memref<128x128xf32, #tpu.memory_space<vmem>>, %arg10: memref<16x128xf32, #tpu.memory_space<vmem>>) attributes {dimension_semantics = [#tpu.dimension_semantics<parallel>], iteration_bounds = array<i64: 3>, scalar_prefetch = 1 : i64, scratch_operands = 0 : i64, tpu.core_type = #tpu.core_type<tc>, window_params = [{transform_indices = @transform_0, window_bounds = array<i64: 16, 128>}, {pipeline_mode = #tpu.pipeline_mode<synchronous>, transform_indices = @transform_1, window_bounds = array<i64: 128, 128>}, {pipeline_mode = #tpu.pipeline_mode<synchronous>, transform_indices = @transform_2, window_bounds = array<i64: 1, 128>}, {transform_indices = @transform_3, window_bounds = array<i64: 1, 128, 128>}, {transform_indices = @transform_4, window_bounds = array<i64: 1, 1, 128>}, {pipeline_mode = #tpu.pipeline_mode<synchronous>, transform_indices = @transform_5, window_bounds = array<i64: 128, 128>}, {pipeline_mode = #tpu.pipeline_mode<synchronous>, transform_indices = @transform_6, window_bounds = array<i64: 1, 128>}, {pipeline_mode = #tpu.pipeline_mode<synchronous>, transform_indices = @transform_7, window_bounds = array<i64: 128, 128>}, {transform_indices = @transform_8, window_bounds = array<i64: 16, 128>}]} {
    %c0 = arith.constant 0 : index
    %c0_0 = arith.constant 0 : index
    %0 = vector.load %arg2[%c0, %c0_0] : memref<16x128xf32, #tpu.memory_space<vmem>>, vector<16x128xf32>
    %c0_1 = arith.constant 0 : index
    %c0_2 = arith.constant 0 : index
    %1 = vector.load %arg3[%c0_1, %c0_2] : memref<128x128xf32, #tpu.memory_space<vmem>>, vector<128x128xf32>
    %cst = arith.constant dense<0.000000e+00> : vector<16x128xf32>
    %2 = tpu.matmul %0, %1, %cst {dimension_numbers = #tpu.dot_dimension_numbers<[1], [0], [0], [1], [0, 0, 1, 1], [], []>} : vector<16x128xf32>, vector<128x128xf32>, vector<16x128xf32> -> vector<16x128xf32>
    %c0_3 = arith.constant 0 : index
    %c0_4 = arith.constant 0 : index
    %3 = vector.load %arg4[%c0_3, %c0_4] : memref<1x128xf32, #tpu.memory_space<vmem>>, vector<1x128xf32>
    %4 = vector.broadcast %3 : vector<1x128xf32> to vector<16x128xf32>
    %5 = arith.addf %2, %4 : vector<16x128xf32>
    %c0_5 = arith.constant 0 : index
    %c0_6 = arith.constant 0 : index
    %c0_7 = arith.constant 0 : index
    %6 = vector.load %arg5[%c0_5, %c0_6, %c0_7] : memref<1x128x128xf32, #tpu.memory_space<vmem>>, vector<1x128x128xf32>
    %7 = vector.shape_cast %6 : vector<1x128x128xf32> to vector<128x128xf32>
    %cst_8 = arith.constant dense<0.000000e+00> : vector<16x128xf32>
    %8 = tpu.matmul %0, %7, %cst_8 {dimension_numbers = #tpu.dot_dimension_numbers<[1], [0], [0], [1], [0, 0, 1, 1], [], []>} : vector<16x128xf32>, vector<128x128xf32>, vector<16x128xf32> -> vector<16x128xf32>
    %c0_9 = arith.constant 0 : index
    %c0_10 = arith.constant 0 : index
    %c0_11 = arith.constant 0 : index
    %9 = vector.load %arg6[%c0_9, %c0_10, %c0_11] : memref<1x1x128xf32, #tpu.memory_space<vmem>>, vector<1x1x128xf32>
    %10 = vector.shape_cast %9 : vector<1x1x128xf32> to vector<1x128xf32>
    %11 = vector.broadcast %10 : vector<1x128xf32> to vector<16x128xf32>
    %12 = arith.addf %8, %11 : vector<16x128xf32>
    %cst_12 = arith.constant 0.000000e+00 : f32
    %13 = vector.broadcast %cst_12 : f32 to vector<16x128xf32>
    %14 = arith.maximumf %5, %13 : vector<16x128xf32>
    %cst_13 = arith.constant 0.000000e+00 : f32
    %15 = vector.broadcast %cst_13 : f32 to vector<16x128xf32>
    %16 = arith.maximumf %12, %15 : vector<16x128xf32>
    %cst_14 = arith.constant 0.899999976 : f32
    %17 = vector.broadcast %cst_14 : f32 to vector<16x128xf32>
    %18 = arith.mulf %17, %16 : vector<16x128xf32>
    %19 = arith.addf %14, %18 : vector<16x128xf32>
    %c0_15 = arith.constant 0 : index
    %c0_16 = arith.constant 0 : index
    %20 = vector.load %arg7[%c0_15, %c0_16] : memref<128x128xf32, #tpu.memory_space<vmem>>, vector<128x128xf32>
    %cst_17 = arith.constant dense<0.000000e+00> : vector<16x128xf32>
    %21 = tpu.matmul %19, %20, %cst_17 {dimension_numbers = #tpu.dot_dimension_numbers<[1], [0], [0], [1], [0, 0, 1, 1], [], []>} : vector<16x128xf32>, vector<128x128xf32>, vector<16x128xf32> -> vector<16x128xf32>
    %c0_18 = arith.constant 0 : index
    %c0_19 = arith.constant 0 : index
    %22 = vector.load %arg8[%c0_18, %c0_19] : memref<1x128xf32, #tpu.memory_space<vmem>>, vector<1x128xf32>
    %23 = vector.broadcast %22 : vector<1x128xf32> to vector<16x128xf32>
    %24 = arith.addf %21, %23 : vector<16x128xf32>
    %cst_20 = arith.constant 0.000000e+00 : f32
    %25 = vector.broadcast %cst_20 : f32 to vector<16x128xf32>
    %26 = arith.maximumf %24, %25 : vector<16x128xf32>
    %c0_21 = arith.constant 0 : index
    %c0_22 = arith.constant 0 : index
    %27 = vector.load %arg9[%c0_21, %c0_22] : memref<128x128xf32, #tpu.memory_space<vmem>>, vector<128x128xf32>
    %cst_23 = arith.constant dense<0.000000e+00> : vector<16x128xf32>
    %28 = tpu.matmul %26, %27, %cst_23 {dimension_numbers = #tpu.dot_dimension_numbers<[1], [0], [0], [1], [0, 0, 1, 1], [], []>} : vector<16x128xf32>, vector<128x128xf32>, vector<16x128xf32> -> vector<16x128xf32>
    %c0_24 = arith.constant 0 : index
    %c0_25 = arith.constant 0 : index
    %29 = vector.load %arg10[%c0_24, %c0_25] : memref<16x128xf32, #tpu.memory_space<vmem>>, vector<16x128xf32>
    tpu.vector_store %arg10[%c0_24, %c0_25], %28 {strides = array<i32>} : memref<16x128xf32, #tpu.memory_space<vmem>>, vector<16x128xf32>,
    return
  }
  func.func @transform_0(%arg0: i32, %arg1: memref<3xi32, #tpu.memory_space<smem>>) -> (i32, i32) {
    %c0_i32 = arith.constant 0 : i32
    %c0_i32_0 = arith.constant 0 : i32
    return %arg0, %c0_i32 : i32, i32
  }
  func.func @transform_1(%arg0: i32, %arg1: memref<3xi32, #tpu.memory_space<smem>>) -> (i32, i32) {
    %c0_i32 = arith.constant 0 : i32
    %c0_i32_0 = arith.constant 0 : i32
    %c0_i32_1 = arith.constant 0 : i32
    return %c0_i32, %c0_i32_0 : i32, i32
  }
  func.func @transform_2(%arg0: i32, %arg1: memref<3xi32, #tpu.memory_space<smem>>) -> (i32, i32) {
    %c0_i32 = arith.constant 0 : i32
    %c0_i32_0 = arith.constant 0 : i32
    %c0_i32_1 = arith.constant 0 : i32
    return %c0_i32, %c0_i32_0 : i32, i32
  }
  func.func @transform_3(%arg0: i32, %arg1: memref<3xi32, #tpu.memory_space<smem>>) -> (i32, i32, i32) {
    %0 = arith.index_cast %arg0 : i32 to index
    %1 = memref.load %arg1[%0] : memref<3xi32, #tpu.memory_space<smem>>
    %c0_i32 = arith.constant 0 : i32
    %c0_i32_0 = arith.constant 0 : i32
    %c0_i32_1 = arith.constant 0 : i32
    return %1, %c0_i32, %c0_i32_0 : i32, i32, i32
  }
  func.func @transform_4(%arg0: i32, %arg1: memref<3xi32, #tpu.memory_space<smem>>) -> (i32, i32, i32) {
    %0 = arith.index_cast %arg0 : i32 to index
    %1 = memref.load %arg1[%0] : memref<3xi32, #tpu.memory_space<smem>>
    %c0_i32 = arith.constant 0 : i32
    %c0_i32_0 = arith.constant 0 : i32
    %c0_i32_1 = arith.constant 0 : i32
    return %1, %c0_i32, %c0_i32_0 : i32, i32, i32
  }
  func.func @transform_5(%arg0: i32, %arg1: memref<3xi32, #tpu.memory_space<smem>>) -> (i32, i32) {
    %c0_i32 = arith.constant 0 : i32
    %c0_i32_0 = arith.constant 0 : i32
    %c0_i32_1 = arith.constant 0 : i32
    return %c0_i32, %c0_i32_0 : i32, i32
  }
  func.func @transform_6(%arg0: i32, %arg1: memref<3xi32, #tpu.memory_space<smem>>) -> (i32, i32) {
    %c0_i32 = arith.constant 0 : i32
    %c0_i32_0 = arith.constant 0 : i32
    %c0_i32_1 = arith.constant 0 : i32
    return %c0_i32, %c0_i32_0 : i32, i32
  }
  func.func @transform_7(%arg0: i32, %arg1: memref<3xi32, #tpu.memory_space<smem>>) -> (i32, i32) {
    %c0_i32 = arith.constant 0 : i32
    %c0_i32_0 = arith.constant 0 : i32
    %c0_i32_1 = arith.constant 0 : i32
    return %c0_i32, %c0_i32_0 : i32, i32
  }
  func.func @transform_8(%arg0: i32, %arg1: memref<3xi32, #tpu.memory_space<smem>>) -> (i32, i32) {
    %c0_i32 = arith.constant 0 : i32
    %c0_i32_0 = arith.constant 0 : i32
    return %arg0, %c0_i32 : i32, i32
  }
}

module attributes {stable_mosaic.version = 11 : i64} {
  func.func @_gated_mlp_kernel(%arg0: i32, %arg1: memref<3xi32, #tpu.memory_space<smem>>, %arg2: memref<16x128xf32, #tpu.memory_space<vmem>>, %arg3: memref<128x128xf32, #tpu.memory_space<vmem>>, %arg4: memref<1x128xf32, #tpu.memory_space<vmem>>, %arg5: memref<1x128x128xf32, #tpu.memory_space<vmem>>, %arg6: memref<1x1x128xf32, #tpu.memory_space<vmem>>, %arg7: memref<128x128xf32, #tpu.memory_space<vmem>>, %arg8: memref<1x128xf32, #tpu.memory_space<vmem>>, %arg9: memref<128x128xf32, #tpu.memory_space<vmem>>, %arg10: memref<16x128xf32, #tpu.memory_space<vmem>>) attributes {dimension_semantics = [#tpu.dimension_semantics<parallel>], iteration_bounds = array<i64: 3>, scalar_prefetch = 1 : i64, scratch_operands = 0 : i64, tpu.core_type = #tpu.core_type<tc>, window_params = [{transform_indices = @transform_0, window_bounds = array<i64: 16, 128>}, {pipeline_mode = #tpu.pipeline_mode<synchronous>, transform_indices = @transform_1, window_bounds = array<i64: 128, 128>}, {pipeline_mode = #tpu.pipeline_mode<synchronous>, transform_indices = @transform_2, window_bounds = array<i64: 1, 128>}, {transform_indices = @transform_3, window_bounds = array<i64: 1, 128, 128>}, {transform_indices = @transform_4, window_bounds = array<i64: 1, 1, 128>}, {pipeline_mode = #tpu.pipeline_mode<synchronous>, transform_indices = @transform_5, window_bounds = array<i64: 128, 128>}, {pipeline_mode = #tpu.pipeline_mode<synchronous>, transform_indices = @transform_6, window_bounds = array<i64: 1, 128>}, {pipeline_mode = #tpu.pipeline_mode<synchronous>, transform_indices = @transform_7, window_bounds = array<i64: 128, 128>}, {transform_indices = @transform_8, window_bounds = array<i64: 16, 128>}]} {
    %c0 = arith.constant 0 : index
    %c0_0 = arith.constant 0 : index
    %0 = vector.load %arg2[%c0, %c0_0] : memref<16x128xf32, #tpu.memory_space<vmem>>, vector<16x128xf32>
    %c0_1 = arith.constant 0 : index
    %c0_2 = arith.constant 0 : index
    %1 = vector.load %arg3[%c0_1, %c0_2] : memref<128x128xf32, #tpu.memory_space<vmem>>, vector<128x128xf32>
    %cst = arith.constant dense<0.000000e+00> : vector<16x128xf32>
    %2 = tpu.matmul %0, %1, %cst {dimension_numbers = #tpu.dot_dimension_numbers<[1], [0], [0], [1], [0, 0, 1, 1], [], []>} : vector<16x128xf32>, vector<128x128xf32>, vector<16x128xf32> -> vector<16x128xf32>
    %c0_3 = arith.constant 0 : index
    %c0_4 = arith.constant 0 : index
    %3 = vector.load %arg4[%c0_3, %c0_4] : memref<1x128xf32, #tpu.memory_space<vmem>>, vector<1x128xf32>
    %4 = vector.broadcast %3 : vector<1x128xf32> to vector<16x128xf32>
    %5 = arith.addf %2, %4 : vector<16x128xf32>
    %c0_5 = arith.constant 0 : index
    %c0_6 = arith.constant 0 : index
    %c0_7 = arith.constant 0 : index
    %6 = vector.load %arg5[%c0_5, %c0_6, %c0_7] : memref<1x128x128xf32, #tpu.memory_space<vmem>>, vector<1x128x128xf32>
    %7 = vector.shape_cast %6 : vector<1x128x128xf32> to vector<128x128xf32>
    %cst_8 = arith.constant dense<0.000000e+00> : vector<16x128xf32>
    %8 = tpu.matmul %0, %7, %cst_8 {dimension_numbers = #tpu.dot_dimension_numbers<[1], [0], [0], [1], [0, 0, 1, 1], [], []>} : vector<16x128xf32>, vector<128x128xf32>, vector<16x128xf32> -> vector<16x128xf32>
    %c0_9 = arith.constant 0 : index
    %c0_10 = arith.constant 0 : index
    %c0_11 = arith.constant 0 : index
    %9 = vector.load %arg6[%c0_9, %c0_10, %c0_11] : memref<1x1x128xf32, #tpu.memory_space<vmem>>, vector<1x1x128xf32>
    %10 = vector.shape_cast %9 : vector<1x1x128xf32> to vector<1x128xf32>
    %11 = vector.broadcast %10 : vector<1x128xf32> to vector<16x128xf32>
    %12 = arith.addf %8, %11 : vector<16x128xf32>
    %cst_12 = arith.constant 0.000000e+00 : f32
    %13 = vector.broadcast %cst_12 : f32 to vector<16x128xf32>
    %14 = arith.maximumf %5, %13 : vector<16x128xf32>
    %cst_13 = arith.constant 0.000000e+00 : f32
    %15 = vector.broadcast %cst_13 : f32 to vector<16x128xf32>
    %16 = arith.maximumf %12, %15 : vector<16x128xf32>
    %cst_14 = arith.constant 0.899999976 : f32
    %17 = vector.broadcast %cst_14 : f32 to vector<16x128xf32>
    %18 = arith.mulf %17, %16 : vector<16x128xf32>
    %19 = arith.addf %14, %18 : vector<16x128xf32>
    %c0_15 = arith.constant 0 : index
    %c0_16 = arith.constant 0 : index
    %20 = vector.load %arg7[%c0_15, %c0_16] : memref<128x128xf32, #tpu.memory_space<vmem>>, vector<128x128xf32>
    %cst_17 = arith.constant dense<0.000000e+00> : vector<16x128xf32>
    %21 = tpu.matmul %19, %20, %cst_17 {dimension_numbers = #tpu.dot_dimension_numbers<[1], [0], [0], [1], [0, 0, 1, 1], [], []>} : vector<16x128xf32>, vector<128x128xf32>, vector<16x128xf32> -> vector<16x128xf32>
    %c0_18 = arith.constant 0 : index
    %c0_19 = arith.constant 0 : index
    %22 = vector.load %arg8[%c0_18, %c0_19] : memref<1x128xf32, #tpu.memory_space<vmem>>, vector<1x128xf32>
    %23 = vector.broadcast %22 : vector<1x128xf32> to vector<16x128xf32>
    %24 = arith.addf %21, %23 : vector<16x128xf32>
    %cst_20 = arith.constant 0.000000e+00 : f32
    %25 = vector.broadcast %cst_20 : f32 to vector<16x128xf32>
    %26 = arith.maximumf %24, %25 : vector<16x128xf32>
    %c0_21 = arith.constant 0 : index
    %c0_22 = arith.constant 0 : index
    %27 = vector.load %arg9[%c0_21, %c0_22] : memref<128x128xf32, #tpu.memory_space<vmem>>, vector<128x128xf32>
    %cst_23 = arith.constant dense<0.000000e+00> : vector<16x128xf32>
    %28 = tpu.matmul %26, %27, %cst_23 {dimension_numbers = #tpu.dot_dimension_numbers<[1], [0], [0], [1], [0, 0, 1, 1], [], []>} : vector<16x128xf32>, vector<128x128xf32>, vector<16x128xf32> -> vector<16x128xf32>
    %c0_24 = arith.constant 0 : index
    %c0_25 = arith.constant 0 : index
    %29 = vector.load %arg10[%c0_24, %c0_25] : memref<16x128xf32, #tpu.memory_space<vmem>>, vector<16x128xf32>
    tpu.vector_store %arg10[%c0_24, %c0_25], %28 {strides = array<i32>} : memref<16x128xf32, #tpu.memory_space<vmem>>, vector<16x128xf32>,
    return
  }
  func.func @transform_0(%arg0: i32, %arg1: memref<3xi32, #tpu.memory_space<smem>>) -> (i32, i32) {
    %c0_i32 = arith.constant 0 : i32
    %c0_i32_0 = arith.constant 0 : i32
    return %arg0, %c0_i32 : i32, i32
  }
  func.func @transform_1(%arg0: i32, %arg1: memref<3xi32, #tpu.memory_space<smem>>) -> (i32, i32) {
    %c0_i32 = arith.constant 0 : i32
    %c0_i32_0 = arith.constant 0 : i32
    %c0_i32_1 = arith.constant 0 : i32
    return %c0_i32, %c0_i32_0 : i32, i32
  }
  func.func @transform_2(%arg0: i32, %arg1: memref<3xi32, #tpu.memory_space<smem>>) -> (i32, i32) {
    %c0_i32 = arith.constant 0 : i32
    %c0_i32_0 = arith.constant 0 : i32
    %c0_i32_1 = arith.constant 0 : i32
    return %c0_i32, %c0_i32_0 : i32, i32
  }
  func.func @transform_3(%arg0: i32, %arg1: memref<3xi32, #tpu.memory_space<smem>>) -> (i32, i32, i32) {
    %0 = arith.index_cast %arg0 : i32 to index
    %1 = memref.load %arg1[%0] : memref<3xi32, #tpu.memory_space<smem>>
    %c0_i32 = arith.constant 0 : i32
    %c0_i32_0 = arith.constant 0 : i32
    %c0_i32_1 = arith.constant 0 : i32
    return %1, %c0_i32, %c0_i32_0 : i32, i32, i32
  }
  func.func @transform_4(%arg0: i32, %arg1: memref<3xi32, #tpu.memory_space<smem>>) -> (i32, i32, i32) {
    %0 = arith.index_cast %arg0 : i32 to index
    %1 = memref.load %arg1[%0] : memref<3xi32, #tpu.memory_space<smem>>
    %c0_i32 = arith.constant 0 : i32
    %c0_i32_0 = arith.constant 0 : i32
    %c0_i32_1 = arith.constant 0 : i32
    return %1, %c0_i32, %c0_i32_0 : i32, i32, i32
  }
  func.func @transform_5(%arg0: i32, %arg1: memref<3xi32, #tpu.memory_space<smem>>) -> (i32, i32) {
    %c0_i32 = arith.constant 0 : i32
    %c0_i32_0 = arith.constant 0 : i32
    %c0_i32_1 = arith.constant 0 : i32
    return %c0_i32, %c0_i32_0 : i32, i32
  }
  func.func @transform_6(%arg0: i32, %arg1: memref<3xi32, #tpu.memory_space<smem>>) -> (i32, i32) {
    %c0_i32 = arith.constant 0 : i32
    %c0_i32_0 = arith.constant 0 : i32
    %c0_i32_1 = arith.constant 0 : i32
    return %c0_i32, %c0_i32_0 : i32, i32
  }
  func.func @transform_7(%arg0: i32, %arg1: memref<3xi32, #tpu.memory_space<smem>>) -> (i32, i32) {
    %c0_i32 = arith.constant 0 : i32
    %c0_i32_0 = arith.constant 0 : i32
    %c0_i32_1 = arith.constant 0 : i32
    return %c0_i32, %c0_i32_0 : i32, i32
  }
  func.func @transform_8(%arg0: i32, %arg1: memref<3xi32, #tpu.memory_space<smem>>) -> (i32, i32) {
    %c0_i32 = arith.constant 0 : i32
    %c0_i32_0 = arith.constant 0 : i32
    return %arg0, %c0_i32 : i32, i32
  }
}

</mosaic_0001>

<llo_original>
// kernel: tpu_custom_call.1
$region0: #{tpu_custom_call.1}
  #allocation0 [shape = 'u32[]', space=smem, size = 0x4, offset = 0x4, fixed_abs, tag = 'smem constant byte address 0x4 - core index']
  #allocation1 [shape = 'u32[144,128]{1,0:T(1,128)}', space=vmem, size = 0x12000, scoped, tag = 'internal scratch']
  #allocation2 [shape = 's32[1]{0}', space=sflag, size = 0x4, scoped, tag = 'scoped memory for tpu_custom_call.1']
  #allocation3 [shape = 'u8[512]{0}', space=smem, size = 0x200, scoped, tag = 'prefetched SMEM operand 0']
  %s0 = inlined_call_operand.hbm [shape: s32[3], index: 0, kind: input, shape index: {}]
  %s1 = inlined_call_operand.hbm [shape: f32[48,128], index: 1, kind: input, shape index: {}]
  %s2 = inlined_call_operand.hbm [shape: f32[128,128], index: 2, kind: input, shape index: {}]
  %s3 = inlined_call_operand.vmem [shape: f32[1,128], index: 3, kind: input, shape index: {}]
  %s4 = inlined_call_operand.hbm [shape: f32[3,128,128], index: 4, kind: input, shape index: {}]
  %s5 = inlined_call_operand.vmem [shape: f32[3,1,128], index: 5, kind: input, shape index: {}]
  %s6 = inlined_call_operand.hbm [shape: f32[128,128], index: 6, kind: input, shape index: {}]
  %s7 = inlined_call_operand.vmem [shape: f32[1,128], index: 7, kind: input, shape index: {}]
  %s8 = inlined_call_operand.hbm [shape: f32[128,128], index: 8, kind: input, shape index: {}]
  %s9 = inlined_call_operand.hbm [shape: f32[48,128], index: 9, kind: output, shape index: {}]
  %s10 = sld [smem:[#allocation0]]
  $region85: #{tpu_custom_call.1} parent=0
    _
  %s12 = ssub.s32 1, %s10
  %s13 = scalar_select 0, %s12, %s10
  %15 = dma.hbm_to_smem %s0, 16, [#allocation3], [#allocation2]
  %16 = dma.done [#allocation2], 16
  %17 = sfence
  $region1: #{tpu_custom_call.1} parent=0
    #allocation4 [shape = 'u8[16384]{0}', space=vmem, size = 0x4000, scoped, tag = 'input window, operand 1']
    #allocation5 [shape = 's32[2]{0}', space=sflag, size = 0x8, scoped, tag = 'scoped memory for tpu_custom_call.1']
    #allocation6 [shape = 's32[2]{0}', space=sflag, size = 0x8, scoped, tag = 'scoped memory for tpu_custom_call.1']
    #allocation7 [shape = 'u8[65536]{0}', space=vmem, size = 0x10000, scoped, tag = 'input window, operand 2, single buffered']
    #allocation8 [shape = 's32[1]{0}', space=sflag, size = 0x4, scoped, tag = 'scoped memory for tpu_custom_call.1']
    #allocation9 [shape = 'u8[131072]{0}', space=vmem, size = 0x20000, scoped, tag = 'input window, operand 4']
    #allocation10 [shape = 'u8[65536]{0}', space=vmem, size = 0x10000, scoped, tag = 'input window, operand 6, single buffered']
    #allocation11 [shape = 'u8[65536]{0}', space=vmem, size = 0x10000, scoped, tag = 'input window, operand 8, single buffered']
    #allocation12 [shape = 's32[1]{0}', space=sflag, size = 0x4, scoped, tag = 'scoped memory for tpu_custom_call.1']
    #allocation13 [shape = 'u8[16384]{0}', space=vmem, size = 0x4000, scoped, tag = 'output window, operand 0']
    %18 = vsyncpa [#allocation5], 0
    %s19 = scalar_lea.sflag [#allocation5], 1
    %20 = vsyncpa %s19, 0
    %21 = vsyncpa [#allocation8], 0
    %22 = vsyncpa [#allocation12], 0
    %23 = vsyncpa [#allocation6], 0
    %s24 = scalar_lea.sflag [#allocation6], 1
    %25 = vsyncpa %s24, 0
    loop: start=0, step=1, limit=5
    $region2: #{tpu_custom_call.1} parent=1 // loop_pre_header
      _
    $region3: #{tpu_custom_call.1} parent=1 // loop_header
      %s27 = sphi 0, %s31
      %p28 = scmp.ge.s32.totalorder %s27, 5
      %s37 = sphi 0, %s39
      %s40 = sphi 0, %s37
      %s41 = sphi 0, %s40
      %s57 = sphi 0, %s41
      %s61 = sphi 0, %s61
      %s63 = sphi 0, %s61
      %s64 = sphi 0, %s63
      %s78 = sphi 0, %s64
      %s82 = sphi 0, %s82
      %s84 = sphi 0, %s82
      %s85 = sphi 0, %s84
      %s99 = sphi 0, %s85
      %s107 = sphi 0, %s109
      %s110 = sphi 0, %s107
      %s111 = sphi 0, %s110
      %s127 = sphi 0, %s111
      %s135 = sphi 0, %s137
      %s138 = sphi 0, %s135
      %s139 = sphi 0, %s138
      %s155 = sphi 0, %s139
      %s159 = sphi 0, %s159
      %s161 = sphi 0, %s159
      %s162 = sphi 0, %s161
      %s176 = sphi 0, %s162
      %s180 = sphi 0, %s180
      %s182 = sphi 0, %s180
      %s183 = sphi 0, %s182
      %s197 = sphi 0, %s183
      %s201 = sphi 0, %s201
      %s203 = sphi 0, %s201
      %s204 = sphi 0, %s203
      %s218 = sphi 0, %s204
      %s224 = sphi 0, %s226
      %s227 = sphi 0, %s224
      %s228 = sphi 0, %s227
      %s244 = sphi 0, %s228
    $region4: #{tpu_custom_call.1} parent=1 // loop_header_branch
      %30 = sbr.rel (%p28) target = $region8
    $region5: #{tpu_custom_call.1} parent=1 // loop_body
      %s32 = ssub.s32 %s27, 1
      %s33 = ssub.s32 %s27, 2
      %s34 = sadd.s32 %s27, 1
      %s35 = ssub.s32 %s27, %s34
      %p36 = scmp.eq.s32.totalorder %s35, 0
      %s38 = sadd.s32 %s37, 1
      %s39 = scalar_select %p36, %s37, %s38
      %p42 = pneg %p36
      %p43 = scmp.eq.s32.totalorder %s27, 2
      %p44 = por %p42, %p43
      %p45 = scmp.ne.s32.totalorder %s37, %s40
      %p46 = scmp.eq.s32.totalorder %s27, 0
      %p47 = por %p45, %p46
      %p48 = scmp.ne.s32.totalorder %s37, %s40
      %p49 = scmp.eq.s32.totalorder %s32, 2
      %p50 = por %p48, %p49
      %p51 = scmp.ne.s32.totalorder %s40, %s41
      %p52 = scmp.eq.s32.totalorder %s32, 0
      %p53 = por %p51, %p52
      %p54 = scmp.ne.s32.totalorder %s40, %s41
      %p55 = scmp.eq.s32.totalorder %s33, 2
      %p56 = por %p54, %p55
      %p58 = scmp.ne.s32.totalorder %s41, %s57
      %p59 = scmp.eq.s32.totalorder %s33, 0
      %p60 = por %p58, %p59
      %s62 = sadd.s32 %s61, 1
      %p65 = scmp.eq.s32.totalorder %s27, 2
      %p66 = scmp.ne.s32.totalorder %s61, %s63
      %p67 = scmp.eq.s32.totalorder %s27, 0
      %p68 = por %p66, %p67
      %p69 = scmp.ne.s32.totalorder %s61, %s63
      %p70 = scmp.eq.s32.totalorder %s32, 2
      %p71 = por %p69, %p70
      %p72 = scmp.ne.s32.totalorder %s63, %s64
      %p73 = scmp.eq.s32.totalorder %s32, 0
      %p74 = por %p72, %p73
      %p75 = scmp.ne.s32.totalorder %s63, %s64
      %p76 = scmp.eq.s32.totalorder %s33, 2
      %p77 = por %p75, %p76
      %p79 = scmp.ne.s32.totalorder %s64, %s78
      %p80 = scmp.eq.s32.totalorder %s33, 0
      %p81 = por %p79, %p80
      %s83 = sadd.s32 %s82, 1
      %p86 = scmp.eq.s32.totalorder %s27, 2
      %p87 = scmp.ne.s32.totalorder %s82, %s84
      %p88 = scmp.eq.s32.totalorder %s27, 0
      %p89 = por %p87, %p88
      %p90 = scmp.ne.s32.totalorder %s82, %s84
      %p91 = scmp.eq.s32.totalorder %s32, 2
      %p92 = por %p90, %p91
      %p93 = scmp.ne.s32.totalorder %s84, %s85
      %p94 = scmp.eq.s32.totalorder %s32, 0
      %p95 = por %p93, %p94
      %p96 = scmp.ne.s32.totalorder %s84, %s85
      %p97 = scmp.eq.s32.totalorder %s33, 2
      %p98 = por %p96, %p97
      %p100 = scmp.ne.s32.totalorder %s85, %s99
      %p101 = scmp.eq.s32.totalorder %s33, 0
      %p102 = por %p100, %p101
      %s103 = sld [smem:[#allocation3 + %s27]]
      %s104 = sld [smem:[#allocation3 + %s34]]
      %s105 = ssub.s32 %s103, %s104
      %p106 = scmp.eq.s32.totalorder %s105, 0
      %s108 = sadd.s32 %s107, 1
      %s109 = scalar_select %p106, %s107, %s108
      %p112 = pneg %p106
      %p113 = scmp.eq.s32.totalorder %s27, 2
      %p114 = por %p112, %p113
      %p115 = scmp.ne.s32.totalorder %s107, %s110
      %p116 = scmp.eq.s32.totalorder %s27, 0
      %p117 = por %p115, %p116
      %p118 = scmp.ne.s32.totalorder %s107, %s110
      %p119 = scmp.eq.s32.totalorder %s32, 2
      %p120 = por %p118, %p119
      %p121 = scmp.ne.s32.totalorder %s110, %s111
      %p122 = scmp.eq.s32.totalorder %s32, 0
      %p123 = por %p121, %p122
      %p124 = scmp.ne.s32.totalorder %s110, %s111
      %p125 = scmp.eq.s32.totalorder %s33, 2
      %p126 = por %p124, %p125
      %p128 = scmp.ne.s32.totalorder %s111, %s127
      %p129 = scmp.eq.s32.totalorder %s33, 0
      %p130 = por %p128, %p129
      %s131 = sld [smem:[#allocation3 + %s27]]
      %s132 = sld [smem:[#allocation3 + %s34]]
      %s133 = ssub.s32 %s131, %s132
      %p134 = scmp.eq.s32.totalorder %s133, 0
      %s136 = sadd.s32 %s135, 1
      %s137 = scalar_select %p134, %s135, %s136
      %p140 = pneg %p134
      %p141 = scmp.eq.s32.totalorder %s27, 2
      %p142 = por %p140, %p141
      %p143 = scmp.ne.s32.totalorder %s135, %s138
      %p144 = scmp.eq.s32.totalorder %s27, 0
      %p145 = por %p143, %p144
      %p146 = scmp.ne.s32.totalorder %s135, %s138
      %p147 = scmp.eq.s32.totalorder %s32, 2
      %p148 = por %p146, %p147
      %p149 = scmp.ne.s32.totalorder %s138, %s139
      %p150 = scmp.eq.s32.totalorder %s32, 0
      %p151 = por %p149, %p150
      %p152 = scmp.ne.s32.totalorder %s138, %s139
      %p153 = scmp.eq.s32.totalorder %s33, 2
      %p154 = por %p152, %p153
      %p156 = scmp.ne.s32.totalorder %s139, %s155
      %p157 = scmp.eq.s32.totalorder %s33, 0
      %p158 = por %p156, %p157
      %s160 = sadd.s32 %s159, 1
      %p163 = scmp.eq.s32.totalorder %s27, 2
      %p164 = scmp.ne.s32.totalorder %s159, %s161
      %p165 = scmp.eq.s32.totalorder %s27, 0
      %p166 = por %p164, %p165
      %p167 = scmp.ne.s32.totalorder %s159, %s161
      %p168 = scmp.eq.s32.totalorder %s32, 2
      %p169 = por %p167, %p168
      %p170 = scmp.ne.s32.totalorder %s161, %s162
      %p171 = scmp.eq.s32.totalorder %s32, 0
      %p172 = por %p170, %p171
      %p173 = scmp.ne.s32.totalorder %s161, %s162
      %p174 = scmp.eq.s32.totalorder %s33, 2
      %p175 = por %p173, %p174
      %p177 = scmp.ne.s32.totalorder %s162, %s176
      %p178 = scmp.eq.s32.totalorder %s33, 0
      %p179 = por %p177, %p178
      %s181 = sadd.s32 %s180, 1
      %p184 = scmp.eq.s32.totalorder %s27, 2
      %p185 = scmp.ne.s32.totalorder %s180, %s182
      %p186 = scmp.eq.s32.totalorder %s27, 0
      %p187 = por %p185, %p186
      %p188 = scmp.ne.s32.totalorder %s180, %s182
      %p189 = scmp.eq.s32.totalorder %s32, 2
      %p190 = por %p188, %p189
      %p191 = scmp.ne.s32.totalorder %s182, %s183
      %p192 = scmp.eq.s32.totalorder %s32, 0
      %p193 = por %p191, %p192
      %p194 = scmp.ne.s32.totalorder %s182, %s183
      %p195 = scmp.eq.s32.totalorder %s33, 2
      %p196 = por %p194, %p195
      %p198 = scmp.ne.s32.totalorder %s183, %s197
      %p199 = scmp.eq.s32.totalorder %s33, 0
      %p200 = por %p198, %p199
      %s202 = sadd.s32 %s201, 1
      %p205 = scmp.eq.s32.totalorder %s27, 2
      %p206 = scmp.ne.s32.totalorder %s201, %s203
      %p207 = scmp.eq.s32.totalorder %s27, 0
      %p208 = por %p206, %p207
      %p209 = scmp.ne.s32.totalorder %s201, %s203
      %p210 = scmp.eq.s32.totalorder %s32, 2
      %p211 = por %p209, %p210
      %p212 = scmp.ne.s32.totalorder %s203, %s204
      %p213 = scmp.eq.s32.totalorder %s32, 0
      %p214 = por %p212, %p213
      %p215 = scmp.ne.s32.totalorder %s203, %s204
      %p216 = scmp.eq.s32.totalorder %s33, 2
      %p217 = por %p215, %p216
      %p219 = scmp.ne.s32.totalorder %s204, %s218
      %p220 = scmp.eq.s32.totalorder %s33, 0
      %p221 = por %p219, %p220
      %s222 = ssub.s32 %s27, %s34
      %p223 = scmp.eq.s32.totalorder %s222, 0
      %s225 = sadd.s32 %s224, 1
      %s226 = scalar_select %p223, %s224, %s225
      %p229 = pneg %p223
      %p230 = scmp.eq.s32.totalorder %s27, 2
      %p231 = por %p229, %p230
      %p232 = scmp.ne.s32.totalorder %s224, %s227
      %p233 = scmp.eq.s32.totalorder %s27, 0
      %p234 = por %p232, %p233
      %p235 = scmp.ne.s32.totalorder %s224, %s227
      %p236 = scmp.eq.s32.totalorder %s32, 2
      %p237 = por %p235, %p236
      %p238 = scmp.ne.s32.totalorder %s227, %s228
      %p239 = scmp.eq.s32.totalorder %s32, 0
      %p240 = por %p238, %p239
      %p241 = scmp.ne.s32.totalorder %s227, %s228
      %p242 = scmp.eq.s32.totalorder %s33, 2
      %p243 = por %p241, %p242
      %p245 = scmp.ne.s32.totalorder %s228, %s244
      %p246 = scmp.eq.s32.totalorder %s33, 0
      %p247 = por %p245, %p246
      %p248 = scmp.le.s32.totalorder 1, %s27
      %p249 = scmp.lt.s32.totalorder %s27, 4
      %p250 = pnand %p248, %p249
      %p251 = pneg %p250
      // Predicated region
      $region9: #{tpu_custom_call.1} parent=5 // pred_check
        _
      $region10: #{tpu_custom_call.1} parent=5 // pred_check_branch
        %253 = sbr.rel (%p250) target = $region12
      $region11: #{tpu_custom_call.1} parent=5 // pred_region
        %s254 = ssub.s32 %s27, 1
        // Predicated region
        $region13: #{tpu_custom_call.1} parent=11 // pred_check
          %p255 = pneg %p74
        $region14: #{tpu_custom_call.1} parent=11 // pred_check_branch
          %257 = sbr.rel (%p255) target = $region16
        $region15: #{tpu_custom_call.1} parent=11 // pred_region
          %s259 = ssub.s32 2048, 2048
          %260 = vsyncadd [#allocation8], %s259
          %s261 = sshll.u32 [#allocation7], 4
          %s262 = int_to_ptr.vmem [resolvable:$true] %s261
          %267 = dma.hbm_to_vmem [thread:$0]  %s2, 2048, %s262, [#allocation8], 128, 128, 8
        $region16: #{tpu_custom_call.1} parent=11 // pred_fallthru
          _
        // Predicated region
        $region17: #{tpu_custom_call.1} parent=11 // pred_check
          %p268 = pneg %p95
        $region18: #{tpu_custom_call.1} parent=11 // pred_check_branch
          %270 = sbr.rel (%p268) target = $region20
        $region19: #{tpu_custom_call.1} parent=11 // pred_region
          _
        $region20: #{tpu_custom_call.1} parent=11 // pred_fallthru
          _
        // Predicated region
        $region21: #{tpu_custom_call.1} parent=11 // pred_check
          %p271 = pneg %p172
        $region22: #{tpu_custom_call.1} parent=11 // pred_check_branch
          %273 = sbr.rel (%p271) target = $region24
        $region23: #{tpu_custom_call.1} parent=11 // pred_region
          %s275 = ssub.s32 2048, 2048
          %276 = vsyncadd [#allocation8], %s275
          %s277 = sshll.u32 [#allocation10], 4
          %s278 = int_to_ptr.vmem [resolvable:$true] %s277
          %283 = dma.hbm_to_vmem [thread:$0]  %s6, 2048, %s278, [#allocation8], 128, 128, 8
        $region24: #{tpu_custom_call.1} parent=11 // pred_fallthru
          _
        // Predicated region
        $region25: #{tpu_custom_call.1} parent=11 // pred_check
          %p284 = pneg %p193
        $region26: #{tpu_custom_call.1} parent=11 // pred_check_branch
          %286 = sbr.rel (%p284) target = $region28
        $region27: #{tpu_custom_call.1} parent=11 // pred_region
          _
        $region28: #{tpu_custom_call.1} parent=11 // pred_fallthru
          _
        // Predicated region
        $region29: #{tpu_custom_call.1} parent=11 // pred_check
          %p287 = pneg %p214
        $region30: #{tpu_custom_call.1} parent=11 // pred_check_branch
          %289 = sbr.rel (%p287) target = $region32
        $region31: #{tpu_custom_call.1} parent=11 // pred_region
          %s291 = ssub.s32 2048, 2048
          %292 = vsyncadd [#allocation12], %s291
          %s293 = sshll.u32 [#allocation11], 4
          %s294 = int_to_ptr.vmem [resolvable:$true] %s293
          %299 = dma.hbm_to_vmem [thread:$0]  %s8, 2048, %s294, [#allocation12], 128, 128, 8
        $region32: #{tpu_custom_call.1} parent=11 // pred_fallthru
          _
      $region12: #{tpu_custom_call.1} parent=5 // pred_fallthru
        _
      %p300 = scmp.lt.s32.totalorder %s27, 3
      // Predicated region
      $region33: #{tpu_custom_call.1} parent=5 // pred_check
        %p301 = pneg %p300
      $region34: #{tpu_custom_call.1} parent=5 // pred_check_branch
        %303 = sbr.rel (%p301) target = $region36
      $region35: #{tpu_custom_call.1} parent=5 // pred_region
        // Predicated region
        $region37: #{tpu_custom_call.1} parent=35 // pred_check
          %p304 = pneg %p47
        $region38: #{tpu_custom_call.1} parent=35 // pred_check_branch
          %306 = sbr.rel (%p304) target = $region40
        $region39: #{tpu_custom_call.1} parent=35 // pred_region
          %s307 = sand.u32 %s27, 1
          %s308 = scalar_lea.sflag [#allocation5], %s307
          %s309 = sand.u32 %s37, 1
          %s310 = smul.addr %s309, 16
          %s311 = scalar_lea.vmem [#allocation4], %s310
          %s312 = smul.u32 2, %s27
          %s314 = ssub.s32 256, 256
          %315 = vsyncadd %s308, %s314
          %s316 = smul.addr %s312, 128
          %s317 = scalar_lea.hbm %s1, %s316
          %s318 = sshll.u32 %s311, 4
          %s319 = int_to_ptr.vmem [resolvable:$true] %s318
          %324 = dma.hbm_to_vmem [thread:$0]  %s317, 256, %s319, %s308, 128, 128, 8
        $region40: #{tpu_custom_call.1} parent=35 // pred_fallthru
          _
        // Predicated region
        $region41: #{tpu_custom_call.1} parent=35 // pred_check
          %p325 = pneg %p117
        $region42: #{tpu_custom_call.1} parent=35 // pred_check_branch
          %327 = sbr.rel (%p325) target = $region44
        $region43: #{tpu_custom_call.1} parent=35 // pred_region
          %s328 = sand.u32 %s27, 1
          %s329 = scalar_lea.sflag [#allocation5], %s328
          %s330 = sand.u32 %s107, 1
          %s331 = smul.addr %s330, 128
          %s332 = scalar_lea.vmem [#allocation9], %s331
          %s333 = sld [smem:[#allocation3 + %s27]]
          %s335 = ssub.s32 2048, 2048
          %336 = vsyncadd %s329, %s335
          %s337 = smul.addr %s333, 16
          %s338 = smul.addr %s337, 128
          %s339 = scalar_lea.hbm %s4, %s338
          %s340 = sshll.u32 %s332, 4
          %s341 = int_to_ptr.vmem [resolvable:$true] %s340
          %346 = dma.hbm_to_vmem [thread:$0]  %s339, 2048, %s341, %s329, 128, 128, 8
        $region44: #{tpu_custom_call.1} parent=35 // pred_fallthru
          _
        // Predicated region
        $region45: #{tpu_custom_call.1} parent=35 // pred_check
          %p347 = pneg %p145
        $region46: #{tpu_custom_call.1} parent=35 // pred_check_branch
          %349 = sbr.rel (%p347) target = $region48
        $region47: #{tpu_custom_call.1} parent=35 // pred_region
          %s350 = sld [smem:[#allocation3 + %s27]]
          %p351 = scmp.lt.s32.totalorder %s350, 2
          %s352 = scalar_select %p351, %s350, 2
          %s353 = scalar_lea.vmem %s5, %s352
          %s354 = sld [smem:[#allocation3 + %s27]]
        $region48: #{tpu_custom_call.1} parent=35 // pred_fallthru
          _
      $region36: #{tpu_custom_call.1} parent=5 // pred_fallthru
        _
      %p355 = scmp.le.s32.totalorder 1, %s27
      %p356 = scmp.lt.s32.totalorder %s27, 4
      %p357 = pnand %p355, %p356
      %p358 = pneg %p357
      // Predicated region
      $region49: #{tpu_custom_call.1} parent=5 // pred_check
        _
      $region50: #{tpu_custom_call.1} parent=5 // pred_check_branch
        %360 = sbr.rel (%p357) target = $region52
      $region51: #{tpu_custom_call.1} parent=5 // pred_region
        %s361 = ssub.s32 %s27, 1
        %s362 = sand.u32 %s32, 1
        %s363 = scalar_lea.sflag [#allocation5], %s362
        %s364 = sand.u32 %s40, 1
        %s365 = smul.addr %s364, 16
        %s366 = scalar_lea.vmem [#allocation4], %s365
        // Predicated region
        $region53: #{tpu_custom_call.1} parent=51 // pred_check
          %p367 = pneg %p53
        $region54: #{tpu_custom_call.1} parent=51 // pred_check_branch
          %369 = sbr.rel (%p367) target = $region56
        $region55: #{tpu_custom_call.1} parent=51 // pred_region
          %370 = dma.done %s363, 256
        $region56: #{tpu_custom_call.1} parent=51 // pred_fallthru
          _
        // Predicated region
        $region57: #{tpu_custom_call.1} parent=51 // pred_check
          %p371 = pneg %p74
        $region58: #{tpu_custom_call.1} parent=51 // pred_check_branch
          %373 = sbr.rel (%p371) target = $region60
        $region59: #{tpu_custom_call.1} parent=51 // pred_region
          %374 = dma.done [#allocation8], 2048
        $region60: #{tpu_custom_call.1} parent=51 // pred_fallthru
          _
        %s375 = sand.u32 %s32, 1
        %s376 = scalar_lea.sflag [#allocation5], %s375
        %s377 = sand.u32 %s110, 1
        %s378 = smul.addr %s377, 128
        %s379 = scalar_lea.vmem [#allocation9], %s378
        // Predicated region
        $region61: #{tpu_custom_call.1} parent=51 // pred_check
          %p380 = pneg %p123
        $region62: #{tpu_custom_call.1} parent=51 // pred_check_branch
          %382 = sbr.rel (%p380) target = $region64
        $region63: #{tpu_custom_call.1} parent=51 // pred_region
          %383 = dma.done %s376, 2048
        $region64: #{tpu_custom_call.1} parent=51 // pred_fallthru
          _
        // Predicated region
        $region65: #{tpu_custom_call.1} parent=51 // pred_check
          %p384 = pneg %p172
        $region66: #{tpu_custom_call.1} parent=51 // pred_check_branch
          %386 = sbr.rel (%p384) target = $region68
        $region67: #{tpu_custom_call.1} parent=51 // pred_region
          %387 = dma.done [#allocation8], 2048
        $region68: #{tpu_custom_call.1} parent=51 // pred_fallthru
          _
        // Predicated region
        $region69: #{tpu_custom_call.1} parent=51 // pred_check
          %p388 = pneg %p214
        $region70: #{tpu_custom_call.1} parent=51 // pred_check_branch
          %390 = sbr.rel (%p388) target = $region72
        $region71: #{tpu_custom_call.1} parent=51 // pred_region
          %391 = dma.done [#allocation12], 2048
        $region72: #{tpu_custom_call.1} parent=51 // pred_fallthru
          _
        %s392 = sand.u32 %s32, 1
        %s393 = scalar_lea.sflag [#allocation5], %s392
        %s394 = sand.u32 %s40, 1
        %s395 = smul.addr %s394, 16
        %s396 = scalar_lea.vmem [#allocation4], %s395
        %p397 = pneg %p53
        %p398 = pneg %p50
        %p399 = pneg %p74
        %p400 = pneg %p71
        %p401 = pneg %p95
        %p402 = pneg %p92
        %s403 = sand.u32 %s32, 1
        %s404 = scalar_lea.sflag [#allocation5], %s403
        %s405 = sand.u32 %s110, 1
        %s406 = smul.addr %s405, 128
        %s407 = scalar_lea.vmem [#allocation9], %s406
        %p408 = pneg %p123
        %p409 = pneg %p120
        %s410 = sld [smem:[#allocation3 + %s32]]
        %p411 = scmp.lt.s32.totalorder %s410, 2
        %s412 = scalar_select %p411, %s410, 2
        %s413 = scalar_lea.vmem %s5, %s412
        %p414 = pneg %p151
        %p415 = pneg %p148
        %p416 = pneg %p172
        %p417 = pneg %p169
        %p418 = pneg %p193
        %p419 = pneg %p190
        %p420 = pneg %p214
        %p421 = pneg %p211
        %p422 = pneg %p240
        %p423 = pneg %p237
        %s424 = sand.u32 %s227, 1
        %s425 = scalar_lea.sflag [#allocation6], %s424
        %s426 = sand.u32 %s227, 1
        %s427 = smul.addr %s426, 16
        %s428 = scalar_lea.vmem [#allocation13], %s427
        %s429 = smul.u32 2, %s32
        %s430 = sld [smem:[#allocation3 + %s32]]
        %s431 = sld [smem:[#allocation3 + %s32]]
        %p432 = scmp.lt.s32.totalorder %s431, 2
        %s433 = scalar_select %p432, %s431, 2
        %s434 = scalar_lea.vmem %s5, %s433
        %s435 = sld [smem:[#allocation3 + %s32]]
        %s436 = smul.u32 2, %s32
        %v437 = vld [vmem:[%s366] sm:$0xff]
        %v438 = vld [vmem:[%s366 + $0x8] sm:$0xff]
        %v439 = vld [vmem:[#allocation7] sm:$0xff]
        %v440 = vld [vmem:[#allocation7 + $0x8] sm:$0xff]
        %v441 = vld [vmem:[#allocation7 + $0x10] sm:$0xff]
        %v442 = vld [vmem:[#allocation7 + $0x18] sm:$0xff]
        %v443 = vld [vmem:[#allocation7 + $0x20] sm:$0xff]
        %v444 = vld [vmem:[#allocation7 + $0x28] sm:$0xff]
        %v445 = vld [vmem:[#allocation7 + $0x30] sm:$0xff]
        %v446 = vld [vmem:[#allocation7 + $0x38] sm:$0xff]
        %v447 = vld [vmem:[#allocation7 + $0x40] sm:$0xff]
        %v448 = vld [vmem:[#allocation7 + $0x48] sm:$0xff]
        %v449 = vld [vmem:[#allocation7 + $0x50] sm:$0xff]
        %v450 = vld [vmem:[#allocation7 + $0x58] sm:$0xff]
        %v451 = vld [vmem:[#allocation7 + $0x60] sm:$0xff]
        %v452 = vld [vmem:[#allocation7 + $0x68] sm:$0xff]
        %v453 = vld [vmem:[#allocation7 + $0x70] sm:$0xff]
        %v454 = vld [vmem:[#allocation7 + $0x78] sm:$0xff]
        %v455 = vld [vmem:[%s3] sm:$0x1]
        %v457 = vlaneseq
        %v458 = vshrl.u32 %v457, 7
        %v459 = vsub.s32 0, %v458
        %v460 = vrot.slane %v455, %v459
        %462 = vmatprep.subr.mxu0 0.0
        %463 = vmatpush1.msra.mxu0 %v439
        %464 = vmatprep.subr.mxu0 0.0
        %465 = vmatpush1.msra.mxu0 %v440
        %466 = vmatprep.subr.mxu0 0.0
        %467 = vmatpush1.msra.mxu0 %v441
        %468 = vmatprep.subr.mxu0 0.0
        %469 = vmatpush1.msra.mxu0 %v442
        %470 = vmatprep.subr.mxu0 0.0
        %471 = vmatpush1.msra.mxu0 %v443
        %472 = vmatprep.subr.mxu0 0.0
        %473 = vmatpush1.msra.mxu0 %v444
        %474 = vmatprep.subr.mxu0 0.0
        %475 = vmatpush1.msra.mxu0 %v445
        %476 = vmatprep.subr.mxu0 0.0
        %477 = vmatpush1.msra.mxu0 %v446
        %478 = vmatprep.subr.mxu0 0.0
        %479 = vmatpush1.msra.mxu0 %v447
        %480 = vmatprep.subr.mxu0 0.0
        %481 = vmatpush1.msra.mxu0 %v448
        %482 = vmatprep.subr.mxu0 0.0
        %483 = vmatpush1.msra.mxu0 %v449
        %484 = vmatprep.subr.mxu0 0.0
        %485 = vmatpush1.msra.mxu0 %v450
        %486 = vmatprep.subr.mxu0 0.0
        %487 = vmatpush1.msra.mxu0 %v451
        %488 = vmatprep.subr.mxu0 0.0
        %489 = vmatpush1.msra.mxu0 %v452
        %490 = vmatprep.subr.mxu0 0.0
        %491 = vmatpush1.msra.mxu0 %v453
        %492 = vmatprep.subr.mxu0 0.0
        %493 = vmatpush1.msra.mxu0 %v454
        %494 = vmatprep.subr.mxu0 0.0
        %495 = vmatpush1.msra.mxu0 0.0
        %496 = vmatprep.subr.mxu0 0.0
        %497 = vmatpush1.msra.mxu0 0.0
        %498 = vmatprep.subr.mxu0 0.0
        %499 = vmatpush1.msra.mxu0 0.0
        %500 = vmatprep.subr.mxu0 0.0
        %501 = vmatpush1.msra.mxu0 0.0
        %502 = vmatprep.subr.mxu0 0.0
        %503 = vmatpush1.msra.mxu0 0.0
        %504 = vmatprep.subr.mxu0 0.0
        %505 = vmatpush1.msra.mxu0 0.0
        %506 = vmatprep.subr.mxu0 0.0
        %507 = vmatpush1.msra.mxu0 0.0
        %508 = vmatprep.subr.mxu0 0.0
        %509 = vmatpush1.msra.mxu0 0.0
        %510 = vmatprep.subr.mxu0 0.0
        %511 = vmatpush1.msra.mxu0 0.0
        %512 = vmatprep.subr.mxu0 0.0
        %513 = vmatpush1.msra.mxu0 0.0
        %514 = vmatprep.subr.mxu0 0.0
        %515 = vmatpush1.msra.mxu0 0.0
        %516 = vmatprep.subr.mxu0 0.0
        %517 = vmatpush1.msra.mxu0 0.0
        %518 = vmatprep.subr.mxu0 0.0
        %519 = vmatpush1.msra.mxu0 0.0
        %520 = vmatprep.subr.mxu0 0.0
        %521 = vmatpush1.msra.mxu0 0.0
        %522 = vmatprep.subr.mxu0 0.0
        %523 = vmatpush1.msra.mxu0 0.0
        %524 = vmatprep.subr.mxu0 0.0
        %525 = vmatpush1.msra.mxu0 0.0
        %526 = vmatprep.mubr.f32.mxu0 0.0
        %527 = vmatmul.mubr.f32.gmra.mrb[0].mxu0 %v437
        %v528 = vpop.f32.mrb[0].mxu0
        %v529 = vadd.f32 %v460, %v528
        %v530 = vpop.f32.mrb[0].mxu0
        %531 = vmatprep.mubr.f32.mxu0 0.0
        %532 = vmatmul.mubr.f32.gmra.mrb[0].mxu0 %v438
        %v533 = vpop.f32.mrb[0].mxu0
        %v534 = vadd.f32 %v460, %v533
        %v535 = vpop.f32.mrb[0].mxu0
        %536 = vdwg.mxu0
        %v537 = vld [vmem:[%s379] sm:$0xff]
        %v538 = vld [vmem:[%s379 + $0x8] sm:$0xff]
        %v539 = vld [vmem:[%s379 + $0x10] sm:$0xff]
        %v540 = vld [vmem:[%s379 + $0x18] sm:$0xff]
        %v541 = vld [vmem:[%s379 + $0x20] sm:$0xff]
        %v542 = vld [vmem:[%s379 + $0x28] sm:$0xff]
        %v543 = vld [vmem:[%s379 + $0x30] sm:$0xff]
        %v544 = vld [vmem:[%s379 + $0x38] sm:$0xff]
        %v545 = vld [vmem:[%s379 + $0x40] sm:$0xff]
        %v546 = vld [vmem:[%s379 + $0x48] sm:$0xff]
        %v547 = vld [vmem:[%s379 + $0x50] sm:$0xff]
        %v548 = vld [vmem:[%s379 + $0x58] sm:$0xff]
        %v549 = vld [vmem:[%s379 + $0x60] sm:$0xff]
        %v550 = vld [vmem:[%s379 + $0x68] sm:$0xff]
        %v551 = vld [vmem:[%s379 + $0x70] sm:$0xff]
        %v552 = vld [vmem:[%s379 + $0x78] sm:$0xff]
        %v553 = vld [vmem:[%s434] sm:$0x1]
        %v555 = vlaneseq
        %v556 = vshrl.u32 %v555, 7
        %v557 = vsub.s32 0, %v556
        %v558 = vrot.slane %v553, %v557
        %560 = vmatprep.subr.mxu0 0.0
        %561 = vmatpush1.msra.mxu0 %v537
        %562 = vmatprep.subr.mxu0 0.0
        %563 = vmatpush1.msra.mxu0 %v538
        %564 = vmatprep.subr.mxu0 0.0
        %565 = vmatpush1.msra.mxu0 %v539
        %566 = vmatprep.subr.mxu0 0.0
        %567 = vmatpush1.msra.mxu0 %v540
        %568 = vmatprep.subr.mxu0 0.0
        %569 = vmatpush1.msra.mxu0 %v541
        %570 = vmatprep.subr.mxu0 0.0
        %571 = vmatpush1.msra.mxu0 %v542
        %572 = vmatprep.subr.mxu0 0.0
        %573 = vmatpush1.msra.mxu0 %v543
        %574 = vmatprep.subr.mxu0 0.0
        %575 = vmatpush1.msra.mxu0 %v544
        %576 = vmatprep.subr.mxu0 0.0
        %577 = vmatpush1.msra.mxu0 %v545
        %578 = vmatprep.subr.mxu0 0.0
        %579 = vmatpush1.msra.mxu0 %v546
        %580 = vmatprep.subr.mxu0 0.0
        %581 = vmatpush1.msra.mxu0 %v547
        %582 = vmatprep.subr.mxu0 0.0
        %583 = vmatpush1.msra.mxu0 %v548
        %584 = vmatprep.subr.mxu0 0.0
        %585 = vmatpush1.msra.mxu0 %v549
        %586 = vmatprep.subr.mxu0 0.0
        %587 = vmatpush1.msra.mxu0 %v550
        %588 = vmatprep.subr.mxu0 0.0
        %589 = vmatpush1.msra.mxu0 %v551
        %590 = vmatprep.subr.mxu0 0.0
        %591 = vmatpush1.msra.mxu0 %v552
        %592 = vmatprep.subr.mxu0 0.0
        %593 = vmatpush1.msra.mxu0 0.0
        %594 = vmatprep.subr.mxu0 0.0
        %595 = vmatpush1.msra.mxu0 0.0
        %596 = vmatprep.subr.mxu0 0.0
        %597 = vmatpush1.msra.mxu0 0.0
        %598 = vmatprep.subr.mxu0 0.0
        %599 = vmatpush1.msra.mxu0 0.0
        %600 = vmatprep.subr.mxu0 0.0
        %601 = vmatpush1.msra.mxu0 0.0
        %602 = vmatprep.subr.mxu0 0.0
        %603 = vmatpush1.msra.mxu0 0.0
        %604 = vmatprep.subr.mxu0 0.0
        %605 = vmatpush1.msra.mxu0 0.0
        %606 = vmatprep.subr.mxu0 0.0
        %607 = vmatpush1.msra.mxu0 0.0
        %608 = vmatprep.subr.mxu0 0.0
        %609 = vmatpush1.msra.mxu0 0.0
        %610 = vmatprep.subr.mxu0 0.0
        %611 = vmatpush1.msra.mxu0 0.0
        %612 = vmatprep.subr.mxu0 0.0
        %613 = vmatpush1.msra.mxu0 0.0
        %614 = vmatprep.subr.mxu0 0.0
        %615 = vmatpush1.msra.mxu0 0.0
        %616 = vmatprep.subr.mxu0 0.0
        %617 = vmatpush1.msra.mxu0 0.0
        %618 = vmatprep.subr.mxu0 0.0
        %619 = vmatpush1.msra.mxu0 0.0
        %620 = vmatprep.subr.mxu0 0.0
        %621 = vmatpush1.msra.mxu0 0.0
        %622 = vmatprep.subr.mxu0 0.0
        %623 = vmatpush1.msra.mxu0 0.0
        %624 = vmatprep.mubr.f32.mxu0 0.0
        %625 = vmatmul.mubr.f32.gmra.mrb[0].mxu0 %v437
        %v626 = vpop.f32.mrb[0].mxu0
        %v627 = vadd.f32 %v558, %v626
        %v628 = vpop.f32.mrb[0].mxu0
        %629 = vmatprep.mubr.f32.mxu0 0.0
        %630 = vmatmul.mubr.f32.gmra.mrb[0].mxu0 %v438
        %v631 = vpop.f32.mrb[0].mxu0
        %v632 = vadd.f32 %v558, %v631
        %v633 = vpop.f32.mrb[0].mxu0
        %634 = vdwg.mxu0
        %v635 = vmax.f32 %v529, 0.0
        %v636 = vmax.f32 %v534, 0.0
        %v637 = vmax.f32 %v627, 0.0
        %v638 = vmax.f32 %v632, 0.0
        %v639 = vmul.f32 %v637, 0.9
        %v640 = vmul.f32 %v638, 0.9
        %v641 = vadd.f32 %v635, %v639
        %v642 = vadd.f32 %v636, %v640
        %v643 = vld [vmem:[#allocation10] sm:$0xff]
        %v644 = vld [vmem:[#allocation10 + $0x8] sm:$0xff]
        %v645 = vld [vmem:[#allocation10 + $0x10] sm:$0xff]
        %v646 = vld [vmem:[#allocation10 + $0x18] sm:$0xff]
        %v647 = vld [vmem:[#allocation10 + $0x20] sm:$0xff]
        %v648 = vld [vmem:[#allocation10 + $0x28] sm:$0xff]
        %v649 = vld [vmem:[#allocation10 + $0x30] sm:$0xff]
        %v650 = vld [vmem:[#allocation10 + $0x38] sm:$0xff]
        %v651 = vld [vmem:[#allocation10 + $0x40] sm:$0xff]
        %v652 = vld [vmem:[#allocation10 + $0x48] sm:$0xff]
        %v653 = vld [vmem:[#allocation10 + $0x50] sm:$0xff]
        %v654 = vld [vmem:[#allocation10 + $0x58] sm:$0xff]
        %v655 = vld [vmem:[#allocation10 + $0x60] sm:$0xff]
        %v656 = vld [vmem:[#allocation10 + $0x68] sm:$0xff]
        %v657 = vld [vmem:[#allocation10 + $0x70] sm:$0xff]
        %v658 = vld [vmem:[#allocation10 + $0x78] sm:$0xff]
        %v659 = vld [vmem:[%s7] sm:$0x1]
        %v661 = vlaneseq
        %v662 = vshrl.u32 %v661, 7
        %v663 = vsub.s32 0, %v662
        %v664 = vrot.slane %v659, %v663
        %666 = vmatprep.subr.mxu0 0.0
        %667 = vmatpush1.msra.mxu0 %v643
        %668 = vmatprep.subr.mxu0 0.0
        %669 = vmatpush1.msra.mxu0 %v644
        %670 = vmatprep.subr.mxu0 0.0
        %671 = vmatpush1.msra.mxu0 %v645
        %672 = vmatprep.subr.mxu0 0.0
        %673 = vmatpush1.msra.mxu0 %v646
        %674 = vmatprep.subr.mxu0 0.0
        %675 = vmatpush1.msra.mxu0 %v647
        %676 = vmatprep.subr.mxu0 0.0
        %677 = vmatpush1.msra.mxu0 %v648
        %678 = vmatprep.subr.mxu0 0.0
        %679 = vmatpush1.msra.mxu0 %v649
        %680 = vmatprep.subr.mxu0 0.0
        %681 = vmatpush1.msra.mxu0 %v650
        %682 = vmatprep.subr.mxu0 0.0
        %683 = vmatpush1.msra.mxu0 %v651
        %684 = vmatprep.subr.mxu0 0.0
        %685 = vmatpush1.msra.mxu0 %v652
        %686 = vmatprep.subr.mxu0 0.0
        %687 = vmatpush1.msra.mxu0 %v653
        %688 = vmatprep.subr.mxu0 0.0
        %689 = vmatpush1.msra.mxu0 %v654
        %690 = vmatprep.subr.mxu0 0.0
        %691 = vmatpush1.msra.mxu0 %v655
        %692 = vmatprep.subr.mxu0 0.0
        %693 = vmatpush1.msra.mxu0 %v656
        %694 = vmatprep.subr.mxu0 0.0
        %695 = vmatpush1.msra.mxu0 %v657
        %696 = vmatprep.subr.mxu0 0.0
        %697 = vmatpush1.msra.mxu0 %v658
        %698 = vmatprep.subr.mxu0 0.0
        %699 = vmatpush1.msra.mxu0 0.0
        %700 = vmatprep.subr.mxu0 0.0
        %701 = vmatpush1.msra.mxu0 0.0
        %702 = vmatprep.subr.mxu0 0.0
        %703 = vmatpush1.msra.mxu0 0.0
        %704 = vmatprep.subr.mxu0 0.0
        %705 = vmatpush1.msra.mxu0 0.0
        %706 = vmatprep.subr.mxu0 0.0
        %707 = vmatpush1.msra.mxu0 0.0
        %708 = vmatprep.subr.mxu0 0.0
        %709 = vmatpush1.msra.mxu0 0.0
        %710 = vmatprep.subr.mxu0 0.0
        %711 = vmatpush1.msra.mxu0 0.0
        %712 = vmatprep.subr.mxu0 0.0
        %713 = vmatpush1.msra.mxu0 0.0
        %714 = vmatprep.subr.mxu0 0.0
        %715 = vmatpush1.msra.mxu0 0.0
        %716 = vmatprep.subr.mxu0 0.0
        %717 = vmatpush1.msra.mxu0 0.0
        %718 = vmatprep.subr.mxu0 0.0
        %719 = vmatpush1.msra.mxu0 0.0
        %720 = vmatprep.subr.mxu0 0.0
        %721 = vmatpush1.msra.mxu0 0.0
        %722 = vmatprep.subr.mxu0 0.0
        %723 = vmatpush1.msra.mxu0 0.0
        %724 = vmatprep.subr.mxu0 0.0
        %725 = vmatpush1.msra.mxu0 0.0
        %726 = vmatprep.subr.mxu0 0.0
        %727 = vmatpush1.msra.mxu0 0.0
        %728 = vmatprep.subr.mxu0 0.0
        %729 = vmatpush1.msra.mxu0 0.0
        %730 = vmatprep.mubr.f32.mxu0 0.0
        %731 = vmatmul.mubr.f32.gmra.mrb[0].mxu0 %v641
        %v732 = vpop.f32.mrb[0].mxu0
        %v733 = vadd.f32 %v664, %v732
        %v734 = vpop.f32.mrb[0].mxu0
        %735 = vmatprep.mubr.f32.mxu0 0.0
        %736 = vmatmul.mubr.f32.gmra.mrb[0].mxu0 %v642
        %v737 = vpop.f32.mrb[0].mxu0
        %v738 = vadd.f32 %v664, %v737
        %v739 = vpop.f32.mrb[0].mxu0
        %740 = vdwg.mxu0
        %v741 = vmax.f32 %v733, 0.0
        %v742 = vmax.f32 %v738, 0.0
        %v743 = vld [vmem:[#allocation11] sm:$0xff]
        %v744 = vld [vmem:[#allocation11 + $0x8] sm:$0xff]
        %v745 = vld [vmem:[#allocation11 + $0x10] sm:$0xff]
        %v746 = vld [vmem:[#allocation11 + $0x18] sm:$0xff]
        %v747 = vld [vmem:[#allocation11 + $0x20] sm:$0xff]
        %v748 = vld [vmem:[#allocation11 + $0x28] sm:$0xff]
        %v749 = vld [vmem:[#allocation11 + $0x30] sm:$0xff]
        %v750 = vld [vmem:[#allocation11 + $0x38] sm:$0xff]
        %v751 = vld [vmem:[#allocation11 + $0x40] sm:$0xff]
        %v752 = vld [vmem:[#allocation11 + $0x48] sm:$0xff]
        %v753 = vld [vmem:[#allocation11 + $0x50] sm:$0xff]
        %v754 = vld [vmem:[#allocation11 + $0x58] sm:$0xff]
        %v755 = vld [vmem:[#allocation11 + $0x60] sm:$0xff]
        %v756 = vld [vmem:[#allocation11 + $0x68] sm:$0xff]
        %v757 = vld [vmem:[#allocation11 + $0x70] sm:$0xff]
        %v758 = vld [vmem:[#allocation11 + $0x78] sm:$0xff]
        %759 = vmatprep.subr.mxu0 0.0
        %760 = vmatpush1.msra.mxu0 %v743
        %761 = vmatprep.subr.mxu0 0.0
        %762 = vmatpush1.msra.mxu0 %v744
        %763 = vmatprep.subr.mxu0 0.0
        %764 = vmatpush1.msra.mxu0 %v745
        %765 = vmatprep.subr.mxu0 0.0
        %766 = vmatpush1.msra.mxu0 %v746
        %767 = vmatprep.subr.mxu0 0.0
        %768 = vmatpush1.msra.mxu0 %v747
        %769 = vmatprep.subr.mxu0 0.0
        %770 = vmatpush1.msra.mxu0 %v748
        %771 = vmatprep.subr.mxu0 0.0
        %772 = vmatpush1.msra.mxu0 %v749
        %773 = vmatprep.subr.mxu0 0.0
        %774 = vmatpush1.msra.mxu0 %v750
        %775 = vmatprep.subr.mxu0 0.0
        %776 = vmatpush1.msra.mxu0 %v751
        %777 = vmatprep.subr.mxu0 0.0
        %778 = vmatpush1.msra.mxu0 %v752
        %779 = vmatprep.subr.mxu0 0.0
        %780 = vmatpush1.msra.mxu0 %v753
        %781 = vmatprep.subr.mxu0 0.0
        %782 = vmatpush1.msra.mxu0 %v754
        %783 = vmatprep.subr.mxu0 0.0
        %784 = vmatpush1.msra.mxu0 %v755
        %785 = vmatprep.subr.mxu0 0.0
        %786 = vmatpush1.msra.mxu0 %v756
        %787 = vmatprep.subr.mxu0 0.0
        %788 = vmatpush1.msra.mxu0 %v757
        %789 = vmatprep.subr.mxu0 0.0
        %790 = vmatpush1.msra.mxu0 %v758
        %791 = vmatprep.subr.mxu0 0.0
        %792 = vmatpush1.msra.mxu0 0.0
        %793 = vmatprep.subr.mxu0 0.0
        %794 = vmatpush1.msra.mxu0 0.0
        %795 = vmatprep.subr.mxu0 0.0
        %796 = vmatpush1.msra.mxu0 0.0
        %797 = vmatprep.subr.mxu0 0.0
        %798 = vmatpush1.msra.mxu0 0.0
        %799 = vmatprep.subr.mxu0 0.0
        %800 = vmatpush1.msra.mxu0 0.0
        %801 = vmatprep.subr.mxu0 0.0
        %802 = vmatpush1.msra.mxu0 0.0
        %803 = vmatprep.subr.mxu0 0.0
        %804 = vmatpush1.msra.mxu0 0.0
        %805 = vmatprep.subr.mxu0 0.0
        %806 = vmatpush1.msra.mxu0 0.0
        %807 = vmatprep.subr.mxu0 0.0
        %808 = vmatpush1.msra.mxu0 0.0
        %809 = vmatprep.subr.mxu0 0.0
        %810 = vmatpush1.msra.mxu0 0.0
        %811 = vmatprep.subr.mxu0 0.0
        %812 = vmatpush1.msra.mxu0 0.0
        %813 = vmatprep.subr.mxu0 0.0
        %814 = vmatpush1.msra.mxu0 0.0
        %815 = vmatprep.subr.mxu0 0.0
        %816 = vmatpush1.msra.mxu0 0.0
        %817 = vmatprep.subr.mxu0 0.0
        %818 = vmatpush1.msra.mxu0 0.0
        %819 = vmatprep.subr.mxu0 0.0
        %820 = vmatpush1.msra.mxu0 0.0
        %821 = vmatprep.subr.mxu0 0.0
        %822 = vmatpush1.msra.mxu0 0.0
        %823 = vmatprep.mubr.f32.mxu0 0.0
        %824 = vmatmul.mubr.f32.gmra.mrb[0].mxu0 %v741
        %v825 = vpop.f32.mrb[0].mxu0
        %v826 = vadd.f32 0.0, %v825
        %v827 = vpop.f32.mrb[0].mxu0
        %828 = vmatprep.mubr.f32.mxu0 0.0
        %829 = vmatmul.mubr.f32.gmra.mrb[0].mxu0 %v742
        %v830 = vpop.f32.mrb[0].mxu0
        %v831 = vadd.f32 0.0, %v830
        %v832 = vpop.f32.mrb[0].mxu0
        %833 = vdwg.mxu0
        %834 = vst [vmem:[%s428] sm:$0xff] %v826
        %835 = vst [vmem:[%s428 + $0x8] sm:$0xff] %v831
        %s836 = sand.u32 %s227, 1
        %s837 = scalar_lea.sflag [#allocation6], %s836
        %s838 = sand.u32 %s227, 1
        %s839 = smul.addr %s838, 16
        %s840 = scalar_lea.vmem [#allocation13], %s839
        // Predicated region
        $region73: #{tpu_custom_call.1} parent=51 // pred_check
          %p841 = pneg %p237
        $region74: #{tpu_custom_call.1} parent=51 // pred_check_branch
          %843 = sbr.rel (%p841) target = $region76
        $region75: #{tpu_custom_call.1} parent=51 // pred_region
          %s844 = smul.u32 2, %s32
          %s846 = ssub.s32 256, 256
          %847 = vsyncadd %s837, %s846
          %s848 = smul.addr %s844, 128
          %s849 = scalar_lea.hbm %s9, %s848
          %s850 = sshll.u32 %s840, 4
          %s851 = int_to_ptr.vmem [resolvable:$true] %s850
          %856 = dma.vmem_to_hbm [thread:$0]  %s851, 256, %s849, %s837, 128, 128, 8
        $region76: #{tpu_custom_call.1} parent=51 // pred_fallthru
          _
      $region52: #{tpu_custom_call.1} parent=5 // pred_fallthru
        _
      %p857 = scmp.le.s32.totalorder 2, %s27
      // Predicated region
      $region77: #{tpu_custom_call.1} parent=5 // pred_check
        %p858 = pneg %p857
      $region78: #{tpu_custom_call.1} parent=5 // pred_check_branch
        %860 = sbr.rel (%p858) target = $region80
      $region79: #{tpu_custom_call.1} parent=5 // pred_region
        %s861 = ssub.s32 %s27, 2
        // Predicated region
        $region81: #{tpu_custom_call.1} parent=79 // pred_check
          %p862 = pneg %p243
        $region82: #{tpu_custom_call.1} parent=79 // pred_check_branch
          %864 = sbr.rel (%p862) target = $region84
        $region83: #{tpu_custom_call.1} parent=79 // pred_region
          %s865 = sand.u32 %s228, 1
          %s866 = scalar_lea.sflag [#allocation6], %s865
          %s867 = sand.u32 %s228, 1
          %s868 = smul.addr %s867, 16
          %s869 = scalar_lea.vmem [#allocation13], %s868
          %870 = dma.done %s866, 256
        $region84: #{tpu_custom_call.1} parent=79 // pred_fallthru
          _
      $region80: #{tpu_custom_call.1} parent=5 // pred_fallthru
        _
    $region6: #{tpu_custom_call.1} parent=1 // loop_footer
      %s31 = sadd.s32 1, %s27
    $region7: #{tpu_custom_call.1} parent=1 // loop_footer_branch
      %26 = sbr.rel target = $region3
    $region8: #{tpu_custom_call.1} parent=1 // loop_exit
      _
    %871 = vsyncpa [#allocation5], 1
    %s872 = scalar_lea.sflag [#allocation5], 1
    %873 = vsyncpa %s872, 1
    %874 = vsyncpa [#allocation8], 1
    %875 = vsyncpa [#allocation12], 1
    %876 = vsyncpa [#allocation6], 1
    %s877 = scalar_lea.sflag [#allocation6], 1
    %878 = vsyncpa %s877, 1

// kernel: tpu_custom_call.1
$region0: #{tpu_custom_call.1}
  #allocation0 [shape = 'u32[]', space=smem, size = 0x4, offset = 0x4, fixed_abs, tag = 'smem constant byte address 0x4 - core index']
  #allocation1 [shape = 'u32[144,128]{1,0:T(1,128)}', space=vmem, size = 0x12000, scoped, tag = 'internal scratch']
  #allocation2 [shape = 's32[1]{0}', space=sflag, size = 0x4, scoped, tag = 'scoped memory for tpu_custom_call.1']
  #allocation3 [shape = 'u8[512]{0}', space=smem, size = 0x200, scoped, tag = 'prefetched SMEM operand 0']
  %s0 = inlined_call_operand.hbm [shape: s32[3], index: 0, kind: input, shape index: {}]
  %s1 = inlined_call_operand.hbm [shape: f32[48,128], index: 1, kind: input, shape index: {}]
  %s2 = inlined_call_operand.hbm [shape: f32[128,128], index: 2, kind: input, shape index: {}]
  %s3 = inlined_call_operand.vmem [shape: f32[1,128], index: 3, kind: input, shape index: {}]
  %s4 = inlined_call_operand.hbm [shape: f32[3,128,128], index: 4, kind: input, shape index: {}]
  %s5 = inlined_call_operand.vmem [shape: f32[3,1,128], index: 5, kind: input, shape index: {}]
  %s6 = inlined_call_operand.hbm [shape: f32[128,128], index: 6, kind: input, shape index: {}]
  %s7 = inlined_call_operand.vmem [shape: f32[1,128], index: 7, kind: input, shape index: {}]
  %s8 = inlined_call_operand.hbm [shape: f32[128,128], index: 8, kind: input, shape index: {}]
  %s9 = inlined_call_operand.hbm [shape: f32[48,128], index: 9, kind: output, shape index: {}]
  %s10 = sld [smem:[#allocation0]]
  $region85: #{tpu_custom_call.1} parent=0
    _
  %s12 = ssub.s32 1, %s10
  %s13 = scalar_select 0, %s12, %s10
  %15 = dma.hbm_to_smem %s0, 16, [#allocation3], [#allocation2]
  %16 = dma.done [#allocation2], 16
  %17 = sfence
  $region1: #{tpu_custom_call.1} parent=0
    #allocation4 [shape = 'u8[16384]{0}', space=vmem, size = 0x4000, scoped, tag = 'input window, operand 1']
    #allocation5 [shape = 's32[2]{0}', space=sflag, size = 0x8, scoped, tag = 'scoped memory for tpu_custom_call.1']
    #allocation6 [shape = 's32[2]{0}', space=sflag, size = 0x8, scoped, tag = 'scoped memory for tpu_custom_call.1']
    #allocation7 [shape = 'u8[65536]{0}', space=vmem, size = 0x10000, scoped, tag = 'input window, operand 2, single buffered']
    #allocation8 [shape = 's32[1]{0}', space=sflag, size = 0x4, scoped, tag = 'scoped memory for tpu_custom_call.1']
    #allocation9 [shape = 'u8[131072]{0}', space=vmem, size = 0x20000, scoped, tag = 'input window, operand 4']
    #allocation10 [shape = 'u8[65536]{0}', space=vmem, size = 0x10000, scoped, tag = 'input window, operand 6, single buffered']
    #allocation11 [shape = 'u8[65536]{0}', space=vmem, size = 0x10000, scoped, tag = 'input window, operand 8, single buffered']
    #allocation12 [shape = 's32[1]{0}', space=sflag, size = 0x4, scoped, tag = 'scoped memory for tpu_custom_call.1']
    #allocation13 [shape = 'u8[16384]{0}', space=vmem, size = 0x4000, scoped, tag = 'output window, operand 0']
    %18 = vsyncpa [#allocation5], 0
    %s19 = scalar_lea.sflag [#allocation5], 1
    %20 = vsyncpa %s19, 0
    %21 = vsyncpa [#allocation8], 0
    %22 = vsyncpa [#allocation12], 0
    %23 = vsyncpa [#allocation6], 0
    %s24 = scalar_lea.sflag [#allocation6], 1
    %25 = vsyncpa %s24, 0
    loop: start=0, step=1, limit=5
    $region2: #{tpu_custom_call.1} parent=1 // loop_pre_header
      _
    $region3: #{tpu_custom_call.1} parent=1 // loop_header
      %s27 = sphi 0, %s31
      %p28 = scmp.ge.s32.totalorder %s27, 5
      %s37 = sphi 0, %s39
      %s40 = sphi 0, %s37
      %s41 = sphi 0, %s40
      %s57 = sphi 0, %s41
      %s61 = sphi 0, %s61
      %s63 = sphi 0, %s61
      %s64 = sphi 0, %s63
      %s78 = sphi 0, %s64
      %s82 = sphi 0, %s82
      %s84 = sphi 0, %s82
      %s85 = sphi 0, %s84
      %s99 = sphi 0, %s85
      %s107 = sphi 0, %s109
      %s110 = sphi 0, %s107
      %s111 = sphi 0, %s110
      %s127 = sphi 0, %s111
      %s135 = sphi 0, %s137
      %s138 = sphi 0, %s135
      %s139 = sphi 0, %s138
      %s155 = sphi 0, %s139
      %s159 = sphi 0, %s159
      %s161 = sphi 0, %s159
      %s162 = sphi 0, %s161
      %s176 = sphi 0, %s162
      %s180 = sphi 0, %s180
      %s182 = sphi 0, %s180
      %s183 = sphi 0, %s182
      %s197 = sphi 0, %s183
      %s201 = sphi 0, %s201
      %s203 = sphi 0, %s201
      %s204 = sphi 0, %s203
      %s218 = sphi 0, %s204
      %s224 = sphi 0, %s226
      %s227 = sphi 0, %s224
      %s228 = sphi 0, %s227
      %s244 = sphi 0, %s228
    $region4: #{tpu_custom_call.1} parent=1 // loop_header_branch
      %30 = sbr.rel (%p28) target = $region8
    $region5: #{tpu_custom_call.1} parent=1 // loop_body
      %s32 = ssub.s32 %s27, 1
      %s33 = ssub.s32 %s27, 2
      %s34 = sadd.s32 %s27, 1
      %s35 = ssub.s32 %s27, %s34
      %p36 = scmp.eq.s32.totalorder %s35, 0
      %s38 = sadd.s32 %s37, 1
      %s39 = scalar_select %p36, %s37, %s38
      %p42 = pneg %p36
      %p43 = scmp.eq.s32.totalorder %s27, 2
      %p44 = por %p42, %p43
      %p45 = scmp.ne.s32.totalorder %s37, %s40
      %p46 = scmp.eq.s32.totalorder %s27, 0
      %p47 = por %p45, %p46
      %p48 = scmp.ne.s32.totalorder %s37, %s40
      %p49 = scmp.eq.s32.totalorder %s32, 2
      %p50 = por %p48, %p49
      %p51 = scmp.ne.s32.totalorder %s40, %s41
      %p52 = scmp.eq.s32.totalorder %s32, 0
      %p53 = por %p51, %p52
      %p54 = scmp.ne.s32.totalorder %s40, %s41
      %p55 = scmp.eq.s32.totalorder %s33, 2
      %p56 = por %p54, %p55
      %p58 = scmp.ne.s32.totalorder %s41, %s57
      %p59 = scmp.eq.s32.totalorder %s33, 0
      %p60 = por %p58, %p59
      %s62 = sadd.s32 %s61, 1
      %p65 = scmp.eq.s32.totalorder %s27, 2
      %p66 = scmp.ne.s32.totalorder %s61, %s63
      %p67 = scmp.eq.s32.totalorder %s27, 0
      %p68 = por %p66, %p67
      %p69 = scmp.ne.s32.totalorder %s61, %s63
      %p70 = scmp.eq.s32.totalorder %s32, 2
      %p71 = por %p69, %p70
      %p72 = scmp.ne.s32.totalorder %s63, %s64
      %p73 = scmp.eq.s32.totalorder %s32, 0
      %p74 = por %p72, %p73
      %p75 = scmp.ne.s32.totalorder %s63, %s64
      %p76 = scmp.eq.s32.totalorder %s33, 2
      %p77 = por %p75, %p76
      %p79 = scmp.ne.s32.totalorder %s64, %s78
      %p80 = scmp.eq.s32.totalorder %s33, 0
      %p81 = por %p79, %p80
      %s83 = sadd.s32 %s82, 1
      %p86 = scmp.eq.s32.totalorder %s27, 2
      %p87 = scmp.ne.s32.totalorder %s82, %s84
      %p88 = scmp.eq.s32.totalorder %s27, 0
      %p89 = por %p87, %p88
      %p90 = scmp.ne.s32.totalorder %s82, %s84
      %p91 = scmp.eq.s32.totalorder %s32, 2
      %p92 = por %p90, %p91
      %p93 = scmp.ne.s32.totalorder %s84, %s85
      %p94 = scmp.eq.s32.totalorder %s32, 0
      %p95 = por %p93, %p94
      %p96 = scmp.ne.s32.totalorder %s84, %s85
      %p97 = scmp.eq.s32.totalorder %s33, 2
      %p98 = por %p96, %p97
      %p100 = scmp.ne.s32.totalorder %s85, %s99
      %p101 = scmp.eq.s32.totalorder %s33, 0
      %p102 = por %p100, %p101
      %s103 = sld [smem:[#allocation3 + %s27]]
      %s104 = sld [smem:[#allocation3 + %s34]]
      %s105 = ssub.s32 %s103, %s104
      %p106 = scmp.eq.s32.totalorder %s105, 0
      %s108 = sadd.s32 %s107, 1
      %s109 = scalar_select %p106, %s107, %s108
      %p112 = pneg %p106
      %p113 = scmp.eq.s32.totalorder %s27, 2
      %p114 = por %p112, %p113
      %p115 = scmp.ne.s32.totalorder %s107, %s110
      %p116 = scmp.eq.s32.totalorder %s27, 0
      %p117 = por %p115, %p116
      %p118 = scmp.ne.s32.totalorder %s107, %s110
      %p119 = scmp.eq.s32.totalorder %s32, 2
      %p120 = por %p118, %p119
      %p121 = scmp.ne.s32.totalorder %s110, %s111
      %p122 = scmp.eq.s32.totalorder %s32, 0
      %p123 = por %p121, %p122
      %p124 = scmp.ne.s32.totalorder %s110, %s111
      %p125 = scmp.eq.s32.totalorder %s33, 2
      %p126 = por %p124, %p125
      %p128 = scmp.ne.s32.totalorder %s111, %s127
      %p129 = scmp.eq.s32.totalorder %s33, 0
      %p130 = por %p128, %p129
      %s131 = sld [smem:[#allocation3 + %s27]]
      %s132 = sld [smem:[#allocation3 + %s34]]
      %s133 = ssub.s32 %s131, %s132
      %p134 = scmp.eq.s32.totalorder %s133, 0
      %s136 = sadd.s32 %s135, 1
      %s137 = scalar_select %p134, %s135, %s136
      %p140 = pneg %p134
      %p141 = scmp.eq.s32.totalorder %s27, 2
      %p142 = por %p140, %p141
      %p143 = scmp.ne.s32.totalorder %s135, %s138
      %p144 = scmp.eq.s32.totalorder %s27, 0
      %p145 = por %p143, %p144
      %p146 = scmp.ne.s32.totalorder %s135, %s138
      %p147 = scmp.eq.s32.totalorder %s32, 2
      %p148 = por %p146, %p147
      %p149 = scmp.ne.s32.totalorder %s138, %s139
      %p150 = scmp.eq.s32.totalorder %s32, 0
      %p151 = por %p149, %p150
      %p152 = scmp.ne.s32.totalorder %s138, %s139
      %p153 = scmp.eq.s32.totalorder %s33, 2
      %p154 = por %p152, %p153
      %p156 = scmp.ne.s32.totalorder %s139, %s155
      %p157 = scmp.eq.s32.totalorder %s33, 0
      %p158 = por %p156, %p157
      %s160 = sadd.s32 %s159, 1
      %p163 = scmp.eq.s32.totalorder %s27, 2
      %p164 = scmp.ne.s32.totalorder %s159, %s161
      %p165 = scmp.eq.s32.totalorder %s27, 0
      %p166 = por %p164, %p165
      %p167 = scmp.ne.s32.totalorder %s159, %s161
      %p168 = scmp.eq.s32.totalorder %s32, 2
      %p169 = por %p167, %p168
      %p170 = scmp.ne.s32.totalorder %s161, %s162
      %p171 = scmp.eq.s32.totalorder %s32, 0
      %p172 = por %p170, %p171
      %p173 = scmp.ne.s32.totalorder %s161, %s162
      %p174 = scmp.eq.s32.totalorder %s33, 2
      %p175 = por %p173, %p174
      %p177 = scmp.ne.s32.totalorder %s162, %s176
      %p178 = scmp.eq.s32.totalorder %s33, 0
      %p179 = por %p177, %p178
      %s181 = sadd.s32 %s180, 1
      %p184 = scmp.eq.s32.totalorder %s27, 2
      %p185 = scmp.ne.s32.totalorder %s180, %s182
      %p186 = scmp.eq.s32.totalorder %s27, 0
      %p187 = por %p185, %p186
      %p188 = scmp.ne.s32.totalorder %s180, %s182
      %p189 = scmp.eq.s32.totalorder %s32, 2
      %p190 = por %p188, %p189
      %p191 = scmp.ne.s32.totalorder %s182, %s183
      %p192 = scmp.eq.s32.totalorder %s32, 0
      %p193 = por %p191, %p192
      %p194 = scmp.ne.s32.totalorder %s182, %s183
      %p195 = scmp.eq.s32.totalorder %s33, 2
      %p196 = por %p194, %p195
      %p198 = scmp.ne.s32.totalorder %s183, %s197
      %p199 = scmp.eq.s32.totalorder %s33, 0
      %p200 = por %p198, %p199
      %s202 = sadd.s32 %s201, 1
      %p205 = scmp.eq.s32.totalorder %s27, 2
      %p206 = scmp.ne.s32.totalorder %s201, %s203
      %p207 = scmp.eq.s32.totalorder %s27, 0
      %p208 = por %p206, %p207
      %p209 = scmp.ne.s32.totalorder %s201, %s203
      %p210 = scmp.eq.s32.totalorder %s32, 2
      %p211 = por %p209, %p210
      %p212 = scmp.ne.s32.totalorder %s203, %s204
      %p213 = scmp.eq.s32.totalorder %s32, 0
      %p214 = por %p212, %p213
      %p215 = scmp.ne.s32.totalorder %s203, %s204
      %p216 = scmp.eq.s32.totalorder %s33, 2
      %p217 = por %p215, %p216
      %p219 = scmp.ne.s32.totalorder %s204, %s218
      %p220 = scmp.eq.s32.totalorder %s33, 0
      %p221 = por %p219, %p220
      %s222 = ssub.s32 %s27, %s34
      %p223 = scmp.eq.s32.totalorder %s222, 0
      %s225 = sadd.s32 %s224, 1
      %s226 = scalar_select %p223, %s224, %s225
      %p229 = pneg %p223
      %p230 = scmp.eq.s32.totalorder %s27, 2
      %p231 = por %p229, %p230
      %p232 = scmp.ne.s32.totalorder %s224, %s227
      %p233 = scmp.eq.s32.totalorder %s27, 0
      %p234 = por %p232, %p233
      %p235 = scmp.ne.s32.totalorder %s224, %s227
      %p236 = scmp.eq.s32.totalorder %s32, 2
      %p237 = por %p235, %p236
      %p238 = scmp.ne.s32.totalorder %s227, %s228
      %p239 = scmp.eq.s32.totalorder %s32, 0
      %p240 = por %p238, %p239
      %p241 = scmp.ne.s32.totalorder %s227, %s228
      %p242 = scmp.eq.s32.totalorder %s33, 2
      %p243 = por %p241, %p242
      %p245 = scmp.ne.s32.totalorder %s228, %s244
      %p246 = scmp.eq.s32.totalorder %s33, 0
      %p247 = por %p245, %p246
      %p248 = scmp.le.s32.totalorder 1, %s27
      %p249 = scmp.lt.s32.totalorder %s27, 4
      %p250 = pnand %p248, %p249
      %p251 = pneg %p250
      // Predicated region
      $region9: #{tpu_custom_call.1} parent=5 // pred_check
        _
      $region10: #{tpu_custom_call.1} parent=5 // pred_check_branch
        %253 = sbr.rel (%p250) target = $region12
      $region11: #{tpu_custom_call.1} parent=5 // pred_region
        %s254 = ssub.s32 %s27, 1
        // Predicated region
        $region13: #{tpu_custom_call.1} parent=11 // pred_check
          %p255 = pneg %p74
        $region14: #{tpu_custom_call.1} parent=11 // pred_check_branch
          %257 = sbr.rel (%p255) target = $region16
        $region15: #{tpu_custom_call.1} parent=11 // pred_region
          %s259 = ssub.s32 2048, 2048
          %260 = vsyncadd [#allocation8], %s259
          %s261 = sshll.u32 [#allocation7], 4
          %s262 = int_to_ptr.vmem [resolvable:$true] %s261
          %267 = dma.hbm_to_vmem [thread:$0]  %s2, 2048, %s262, [#allocation8], 128, 128, 8
        $region16: #{tpu_custom_call.1} parent=11 // pred_fallthru
          _
        // Predicated region
        $region17: #{tpu_custom_call.1} parent=11 // pred_check
          %p268 = pneg %p95
        $region18: #{tpu_custom_call.1} parent=11 // pred_check_branch
          %270 = sbr.rel (%p268) target = $region20
        $region19: #{tpu_custom_call.1} parent=11 // pred_region
          _
        $region20: #{tpu_custom_call.1} parent=11 // pred_fallthru
          _
        // Predicated region
        $region21: #{tpu_custom_call.1} parent=11 // pred_check
          %p271 = pneg %p172
        $region22: #{tpu_custom_call.1} parent=11 // pred_check_branch
          %273 = sbr.rel (%p271) target = $region24
        $region23: #{tpu_custom_call.1} parent=11 // pred_region
          %s275 = ssub.s32 2048, 2048
          %276 = vsyncadd [#allocation8], %s275
          %s277 = sshll.u32 [#allocation10], 4
          %s278 = int_to_ptr.vmem [resolvable:$true] %s277
          %283 = dma.hbm_to_vmem [thread:$0]  %s6, 2048, %s278, [#allocation8], 128, 128, 8
        $region24: #{tpu_custom_call.1} parent=11 // pred_fallthru
          _
        // Predicated region
        $region25: #{tpu_custom_call.1} parent=11 // pred_check
          %p284 = pneg %p193
        $region26: #{tpu_custom_call.1} parent=11 // pred_check_branch
          %286 = sbr.rel (%p284) target = $region28
        $region27: #{tpu_custom_call.1} parent=11 // pred_region
          _
        $region28: #{tpu_custom_call.1} parent=11 // pred_fallthru
          _
        // Predicated region
        $region29: #{tpu_custom_call.1} parent=11 // pred_check
          %p287 = pneg %p214
        $region30: #{tpu_custom_call.1} parent=11 // pred_check_branch
          %289 = sbr.rel (%p287) target = $region32
        $region31: #{tpu_custom_call.1} parent=11 // pred_region
          %s291 = ssub.s32 2048, 2048
          %292 = vsyncadd [#allocation12], %s291
          %s293 = sshll.u32 [#allocation11], 4
          %s294 = int_to_ptr.vmem [resolvable:$true] %s293
          %299 = dma.hbm_to_vmem [thread:$0]  %s8, 2048, %s294, [#allocation12], 128, 128, 8
        $region32: #{tpu_custom_call.1} parent=11 // pred_fallthru
          _
      $region12: #{tpu_custom_call.1} parent=5 // pred_fallthru
        _
      %p300 = scmp.lt.s32.totalorder %s27, 3
      // Predicated region
      $region33: #{tpu_custom_call.1} parent=5 // pred_check
        %p301 = pneg %p300
      $region34: #{tpu_custom_call.1} parent=5 // pred_check_branch
        %303 = sbr.rel (%p301) target = $region36
      $region35: #{tpu_custom_call.1} parent=5 // pred_region
        // Predicated region
        $region37: #{tpu_custom_call.1} parent=35 // pred_check
          %p304 = pneg %p47
        $region38: #{tpu_custom_call.1} parent=35 // pred_check_branch
          %306 = sbr.rel (%p304) target = $region40
        $region39: #{tpu_custom_call.1} parent=35 // pred_region
          %s307 = sand.u32 %s27, 1
          %s308 = scalar_lea.sflag [#allocation5], %s307
          %s309 = sand.u32 %s37, 1
          %s310 = smul.addr %s309, 16
          %s311 = scalar_lea.vmem [#allocation4], %s310
          %s312 = smul.u32 2, %s27
          %s314 = ssub.s32 256, 256
          %315 = vsyncadd %s308, %s314
          %s316 = smul.addr %s312, 128
          %s317 = scalar_lea.hbm %s1, %s316
          %s318 = sshll.u32 %s311, 4
          %s319 = int_to_ptr.vmem [resolvable:$true] %s318
          %324 = dma.hbm_to_vmem [thread:$0]  %s317, 256, %s319, %s308, 128, 128, 8
        $region40: #{tpu_custom_call.1} parent=35 // pred_fallthru
          _
        // Predicated region
        $region41: #{tpu_custom_call.1} parent=35 // pred_check
          %p325 = pneg %p117
        $region42: #{tpu_custom_call.1} parent=35 // pred_check_branch
          %327 = sbr.rel (%p325) target = $region44
        $region43: #{tpu_custom_call.1} parent=35 // pred_region
          %s328 = sand.u32 %s27, 1
          %s329 = scalar_lea.sflag [#allocation5], %s328
          %s330 = sand.u32 %s107, 1
          %s331 = smul.addr %s330, 128
          %s332 = scalar_lea.vmem [#allocation9], %s331
          %s333 = sld [smem:[#allocation3 + %s27]]
          %s335 = ssub.s32 2048, 2048
          %336 = vsyncadd %s329, %s335
          %s337 = smul.addr %s333, 16
          %s338 = smul.addr %s337, 128
          %s339 = scalar_lea.hbm %s4, %s338
          %s340 = sshll.u32 %s332, 4
          %s341 = int_to_ptr.vmem [resolvable:$true] %s340
          %346 = dma.hbm_to_vmem [thread:$0]  %s339, 2048, %s341, %s329, 128, 128, 8
        $region44: #{tpu_custom_call.1} parent=35 // pred_fallthru
          _
        // Predicated region
        $region45: #{tpu_custom_call.1} parent=35 // pred_check
          %p347 = pneg %p145
        $region46: #{tpu_custom_call.1} parent=35 // pred_check_branch
          %349 = sbr.rel (%p347) target = $region48
        $region47: #{tpu_custom_call.1} parent=35 // pred_region
          %s350 = sld [smem:[#allocation3 + %s27]]
          %p351 = scmp.lt.s32.totalorder %s350, 2
          %s352 = scalar_select %p351, %s350, 2
          %s353 = scalar_lea.vmem %s5, %s352
          %s354 = sld [smem:[#allocation3 + %s27]]
        $region48: #{tpu_custom_call.1} parent=35 // pred_fallthru
          _
      $region36: #{tpu_custom_call.1} parent=5 // pred_fallthru
        _
      %p355 = scmp.le.s32.totalorder 1, %s27
      %p356 = scmp.lt.s32.totalorder %s27, 4
      %p357 = pnand %p355, %p356
      %p358 = pneg %p357
      // Predicated region
      $region49: #{tpu_custom_call.1} parent=5 // pred_check
        _
      $region50: #{tpu_custom_call.1} parent=5 // pred_check_branch
        %360 = sbr.rel (%p357) target = $region52
      $region51: #{tpu_custom_call.1} parent=5 // pred_region
        %s361 = ssub.s32 %s27, 1
        %s362 = sand.u32 %s32, 1
        %s363 = scalar_lea.sflag [#allocation5], %s362
        %s364 = sand.u32 %s40, 1
        %s365 = smul.addr %s364, 16
        %s366 = scalar_lea.vmem [#allocation4], %s365
        // Predicated region
        $region53: #{tpu_custom_call.1} parent=51 // pred_check
          %p367 = pneg %p53
        $region54: #{tpu_custom_call.1} parent=51 // pred_check_branch
          %369 = sbr.rel (%p367) target = $region56
        $region55: #{tpu_custom_call.1} parent=51 // pred_region
          %370 = dma.done %s363, 256
        $region56: #{tpu_custom_call.1} parent=51 // pred_fallthru
          _
        // Predicated region
        $region57: #{tpu_custom_call.1} parent=51 // pred_check
          %p371 = pneg %p74
        $region58: #{tpu_custom_call.1} parent=51 // pred_check_branch
          %373 = sbr.rel (%p371) target = $region60
        $region59: #{tpu_custom_call.1} parent=51 // pred_region
          %374 = dma.done [#allocation8], 2048
        $region60: #{tpu_custom_call.1} parent=51 // pred_fallthru
          _
        %s375 = sand.u32 %s32, 1
        %s376 = scalar_lea.sflag [#allocation5], %s375
        %s377 = sand.u32 %s110, 1
        %s378 = smul.addr %s377, 128
        %s379 = scalar_lea.vmem [#allocation9], %s378
        // Predicated region
        $region61: #{tpu_custom_call.1} parent=51 // pred_check
          %p380 = pneg %p123
        $region62: #{tpu_custom_call.1} parent=51 // pred_check_branch
          %382 = sbr.rel (%p380) target = $region64
        $region63: #{tpu_custom_call.1} parent=51 // pred_region
          %383 = dma.done %s376, 2048
        $region64: #{tpu_custom_call.1} parent=51 // pred_fallthru
          _
        // Predicated region
        $region65: #{tpu_custom_call.1} parent=51 // pred_check
          %p384 = pneg %p172
        $region66: #{tpu_custom_call.1} parent=51 // pred_check_branch
          %386 = sbr.rel (%p384) target = $region68
        $region67: #{tpu_custom_call.1} parent=51 // pred_region
          %387 = dma.done [#allocation8], 2048
        $region68: #{tpu_custom_call.1} parent=51 // pred_fallthru
          _
        // Predicated region
        $region69: #{tpu_custom_call.1} parent=51 // pred_check
          %p388 = pneg %p214
        $region70: #{tpu_custom_call.1} parent=51 // pred_check_branch
          %390 = sbr.rel (%p388) target = $region72
        $region71: #{tpu_custom_call.1} parent=51 // pred_region
          %391 = dma.done [#allocation12], 2048
        $region72: #{tpu_custom_call.1} parent=51 // pred_fallthru
          _
        %s392 = sand.u32 %s32, 1
        %s393 = scalar_lea.sflag [#allocation5], %s392
        %s394 = sand.u32 %s40, 1
        %s395 = smul.addr %s394, 16
        %s396 = scalar_lea.vmem [#allocation4], %s395
        %p397 = pneg %p53
        %p398 = pneg %p50
        %p399 = pneg %p74
        %p400 = pneg %p71
        %p401 = pneg %p95
        %p402 = pneg %p92
        %s403 = sand.u32 %s32, 1
        %s404 = scalar_lea.sflag [#allocation5], %s403
        %s405 = sand.u32 %s110, 1
        %s406 = smul.addr %s405, 128
        %s407 = scalar_lea.vmem [#allocation9], %s406
        %p408 = pneg %p123
        %p409 = pneg %p120
        %s410 = sld [smem:[#allocation3 + %s32]]
        %p411 = scmp.lt.s32.totalorder %s410, 2
        %s412 = scalar_select %p411, %s410, 2
        %s413 = scalar_lea.vmem %s5, %s412
        %p414 = pneg %p151
        %p415 = pneg %p148
        %p416 = pneg %p172
        %p417 = pneg %p169
        %p418 = pneg %p193
        %p419 = pneg %p190
        %p420 = pneg %p214
        %p421 = pneg %p211
        %p422 = pneg %p240
        %p423 = pneg %p237
        %s424 = sand.u32 %s227, 1
        %s425 = scalar_lea.sflag [#allocation6], %s424
        %s426 = sand.u32 %s227, 1
        %s427 = smul.addr %s426, 16
        %s428 = scalar_lea.vmem [#allocation13], %s427
        %s429 = smul.u32 2, %s32
        %s430 = sld [smem:[#allocation3 + %s32]]
        %s431 = sld [smem:[#allocation3 + %s32]]
        %p432 = scmp.lt.s32.totalorder %s431, 2
        %s433 = scalar_select %p432, %s431, 2
        %s434 = scalar_lea.vmem %s5, %s433
        %s435 = sld [smem:[#allocation3 + %s32]]
        %s436 = smul.u32 2, %s32
        %v437 = vld [vmem:[%s366] sm:$0xff]
        %v438 = vld [vmem:[%s366 + $0x8] sm:$0xff]
        %v439 = vld [vmem:[#allocation7] sm:$0xff]
        %v440 = vld [vmem:[#allocation7 + $0x8] sm:$0xff]
        %v441 = vld [vmem:[#allocation7 + $0x10] sm:$0xff]
        %v442 = vld [vmem:[#allocation7 + $0x18] sm:$0xff]
        %v443 = vld [vmem:[#allocation7 + $0x20] sm:$0xff]
        %v444 = vld [vmem:[#allocation7 + $0x28] sm:$0xff]
        %v445 = vld [vmem:[#allocation7 + $0x30] sm:$0xff]
        %v446 = vld [vmem:[#allocation7 + $0x38] sm:$0xff]
        %v447 = vld [vmem:[#allocation7 + $0x40] sm:$0xff]
        %v448 = vld [vmem:[#allocation7 + $0x48] sm:$0xff]
        %v449 = vld [vmem:[#allocation7 + $0x50] sm:$0xff]
        %v450 = vld [vmem:[#allocation7 + $0x58] sm:$0xff]
        %v451 = vld [vmem:[#allocation7 + $0x60] sm:$0xff]
        %v452 = vld [vmem:[#allocation7 + $0x68] sm:$0xff]
        %v453 = vld [vmem:[#allocation7 + $0x70] sm:$0xff]
        %v454 = vld [vmem:[#allocation7 + $0x78] sm:$0xff]
        %v455 = vld [vmem:[%s3] sm:$0x1]
        %v457 = vlaneseq
        %v458 = vshrl.u32 %v457, 7
        %v459 = vsub.s32 0, %v458
        %v460 = vrot.slane %v455, %v459
        %462 = vmatprep.subr.mxu0 0.0
        %463 = vmatpush1.msra.mxu0 %v439
        %464 = vmatprep.subr.mxu0 0.0
        %465 = vmatpush1.msra.mxu0 %v440
        %466 = vmatprep.subr.mxu0 0.0
        %467 = vmatpush1.msra.mxu0 %v441
        %468 = vmatprep.subr.mxu0 0.0
        %469 = vmatpush1.msra.mxu0 %v442
        %470 = vmatprep.subr.mxu0 0.0
        %471 = vmatpush1.msra.mxu0 %v443
        %472 = vmatprep.subr.mxu0 0.0
        %473 = vmatpush1.msra.mxu0 %v444
        %474 = vmatprep.subr.mxu0 0.0
        %475 = vmatpush1.msra.mxu0 %v445
        %476 = vmatprep.subr.mxu0 0.0
        %477 = vmatpush1.msra.mxu0 %v446
        %478 = vmatprep.subr.mxu0 0.0
        %479 = vmatpush1.msra.mxu0 %v447
        %480 = vmatprep.subr.mxu0 0.0
        %481 = vmatpush1.msra.mxu0 %v448
        %482 = vmatprep.subr.mxu0 0.0
        %483 = vmatpush1.msra.mxu0 %v449
        %484 = vmatprep.subr.mxu0 0.0
        %485 = vmatpush1.msra.mxu0 %v450
        %486 = vmatprep.subr.mxu0 0.0
        %487 = vmatpush1.msra.mxu0 %v451
        %488 = vmatprep.subr.mxu0 0.0
        %489 = vmatpush1.msra.mxu0 %v452
        %490 = vmatprep.subr.mxu0 0.0
        %491 = vmatpush1.msra.mxu0 %v453
        %492 = vmatprep.subr.mxu0 0.0
        %493 = vmatpush1.msra.mxu0 %v454
        %494 = vmatprep.subr.mxu0 0.0
        %495 = vmatpush1.msra.mxu0 0.0
        %496 = vmatprep.subr.mxu0 0.0
        %497 = vmatpush1.msra.mxu0 0.0
        %498 = vmatprep.subr.mxu0 0.0
        %499 = vmatpush1.msra.mxu0 0.0
        %500 = vmatprep.subr.mxu0 0.0
        %501 = vmatpush1.msra.mxu0 0.0
        %502 = vmatprep.subr.mxu0 0.0
        %503 = vmatpush1.msra.mxu0 0.0
        %504 = vmatprep.subr.mxu0 0.0
        %505 = vmatpush1.msra.mxu0 0.0
        %506 = vmatprep.subr.mxu0 0.0
        %507 = vmatpush1.msra.mxu0 0.0
        %508 = vmatprep.subr.mxu0 0.0
        %509 = vmatpush1.msra.mxu0 0.0
        %510 = vmatprep.subr.mxu0 0.0
        %511 = vmatpush1.msra.mxu0 0.0
        %512 = vmatprep.subr.mxu0 0.0
        %513 = vmatpush1.msra.mxu0 0.0
        %514 = vmatprep.subr.mxu0 0.0
        %515 = vmatpush1.msra.mxu0 0.0
        %516 = vmatprep.subr.mxu0 0.0
        %517 = vmatpush1.msra.mxu0 0.0
        %518 = vmatprep.subr.mxu0 0.0
        %519 = vmatpush1.msra.mxu0 0.0
        %520 = vmatprep.subr.mxu0 0.0
        %521 = vmatpush1.msra.mxu0 0.0
        %522 = vmatprep.subr.mxu0 0.0
        %523 = vmatpush1.msra.mxu0 0.0
        %524 = vmatprep.subr.mxu0 0.0
        %525 = vmatpush1.msra.mxu0 0.0
        %526 = vmatprep.mubr.f32.mxu0 0.0
        %527 = vmatmul.mubr.f32.gmra.mrb[0].mxu0 %v437
        %v528 = vpop.f32.mrb[0].mxu0
        %v529 = vadd.f32 %v460, %v528
        %v530 = vpop.f32.mrb[0].mxu0
        %531 = vmatprep.mubr.f32.mxu0 0.0
        %532 = vmatmul.mubr.f32.gmra.mrb[0].mxu0 %v438
        %v533 = vpop.f32.mrb[0].mxu0
        %v534 = vadd.f32 %v460, %v533
        %v535 = vpop.f32.mrb[0].mxu0
        %536 = vdwg.mxu0
        %v537 = vld [vmem:[%s379] sm:$0xff]
        %v538 = vld [vmem:[%s379 + $0x8] sm:$0xff]
        %v539 = vld [vmem:[%s379 + $0x10] sm:$0xff]
        %v540 = vld [vmem:[%s379 + $0x18] sm:$0xff]
        %v541 = vld [vmem:[%s379 + $0x20] sm:$0xff]
        %v542 = vld [vmem:[%s379 + $0x28] sm:$0xff]
        %v543 = vld [vmem:[%s379 + $0x30] sm:$0xff]
        %v544 = vld [vmem:[%s379 + $0x38] sm:$0xff]
        %v545 = vld [vmem:[%s379 + $0x40] sm:$0xff]
        %v546 = vld [vmem:[%s379 + $0x48] sm:$0xff]
        %v547 = vld [vmem:[%s379 + $0x50] sm:$0xff]
        %v548 = vld [vmem:[%s379 + $0x58] sm:$0xff]
        %v549 = vld [vmem:[%s379 + $0x60] sm:$0xff]
        %v550 = vld [vmem:[%s379 + $0x68] sm:$0xff]
        %v551 = vld [vmem:[%s379 + $0x70] sm:$0xff]
        %v552 = vld [vmem:[%s379 + $0x78] sm:$0xff]
        %v553 = vld [vmem:[%s434] sm:$0x1]
        %v555 = vlaneseq
        %v556 = vshrl.u32 %v555, 7
        %v557 = vsub.s32 0, %v556
        %v558 = vrot.slane %v553, %v557
        %560 = vmatprep.subr.mxu0 0.0
        %561 = vmatpush1.msra.mxu0 %v537
        %562 = vmatprep.subr.mxu0 0.0
        %563 = vmatpush1.msra.mxu0 %v538
        %564 = vmatprep.subr.mxu0 0.0
        %565 = vmatpush1.msra.mxu0 %v539
        %566 = vmatprep.subr.mxu0 0.0
        %567 = vmatpush1.msra.mxu0 %v540
        %568 = vmatprep.subr.mxu0 0.0
        %569 = vmatpush1.msra.mxu0 %v541
        %570 = vmatprep.subr.mxu0 0.0
        %571 = vmatpush1.msra.mxu0 %v542
        %572 = vmatprep.subr.mxu0 0.0
        %573 = vmatpush1.msra.mxu0 %v543
        %574 = vmatprep.subr.mxu0 0.0
        %575 = vmatpush1.msra.mxu0 %v544
        %576 = vmatprep.subr.mxu0 0.0
        %577 = vmatpush1.msra.mxu0 %v545
        %578 = vmatprep.subr.mxu0 0.0
        %579 = vmatpush1.msra.mxu0 %v546
        %580 = vmatprep.subr.mxu0 0.0
        %581 = vmatpush1.msra.mxu0 %v547
        %582 = vmatprep.subr.mxu0 0.0
        %583 = vmatpush1.msra.mxu0 %v548
        %584 = vmatprep.subr.mxu0 0.0
        %585 = vmatpush1.msra.mxu0 %v549
        %586 = vmatprep.subr.mxu0 0.0
        %587 = vmatpush1.msra.mxu0 %v550
        %588 = vmatprep.subr.mxu0 0.0
        %589 = vmatpush1.msra.mxu0 %v551
        %590 = vmatprep.subr.mxu0 0.0
        %591 = vmatpush1.msra.mxu0 %v552
        %592 = vmatprep.subr.mxu0 0.0
        %593 = vmatpush1.msra.mxu0 0.0
        %594 = vmatprep.subr.mxu0 0.0
        %595 = vmatpush1.msra.mxu0 0.0
        %596 = vmatprep.subr.mxu0 0.0
        %597 = vmatpush1.msra.mxu0 0.0
        %598 = vmatprep.subr.mxu0 0.0
        %599 = vmatpush1.msra.mxu0 0.0
        %600 = vmatprep.subr.mxu0 0.0
        %601 = vmatpush1.msra.mxu0 0.0
        %602 = vmatprep.subr.mxu0 0.0
        %603 = vmatpush1.msra.mxu0 0.0
        %604 = vmatprep.subr.mxu0 0.0
        %605 = vmatpush1.msra.mxu0 0.0
        %606 = vmatprep.subr.mxu0 0.0
        %607 = vmatpush1.msra.mxu0 0.0
        %608 = vmatprep.subr.mxu0 0.0
        %609 = vmatpush1.msra.mxu0 0.0
        %610 = vmatprep.subr.mxu0 0.0
        %611 = vmatpush1.msra.mxu0 0.0
        %612 = vmatprep.subr.mxu0 0.0
        %613 = vmatpush1.msra.mxu0 0.0
        %614 = vmatprep.subr.mxu0 0.0
        %615 = vmatpush1.msra.mxu0 0.0
        %616 = vmatprep.subr.mxu0 0.0
        %617 = vmatpush1.msra.mxu0 0.0
        %618 = vmatprep.subr.mxu0 0.0
        %619 = vmatpush1.msra.mxu0 0.0
        %620 = vmatprep.subr.mxu0 0.0
        %621 = vmatpush1.msra.mxu0 0.0
        %622 = vmatprep.subr.mxu0 0.0
        %623 = vmatpush1.msra.mxu0 0.0
        %624 = vmatprep.mubr.f32.mxu0 0.0
        %625 = vmatmul.mubr.f32.gmra.mrb[0].mxu0 %v437
        %v626 = vpop.f32.mrb[0].mxu0
        %v627 = vadd.f32 %v558, %v626
        %v628 = vpop.f32.mrb[0].mxu0
        %629 = vmatprep.mubr.f32.mxu0 0.0
        %630 = vmatmul.mubr.f32.gmra.mrb[0].mxu0 %v438
        %v631 = vpop.f32.mrb[0].mxu0
        %v632 = vadd.f32 %v558, %v631
        %v633 = vpop.f32.mrb[0].mxu0
        %634 = vdwg.mxu0
        %v635 = vmax.f32 %v529, 0.0
        %v636 = vmax.f32 %v534, 0.0
        %v637 = vmax.f32 %v627, 0.0
        %v638 = vmax.f32 %v632, 0.0
        %v639 = vmul.f32 %v637, 0.9
        %v640 = vmul.f32 %v638, 0.9
        %v641 = vadd.f32 %v635, %v639
        %v642 = vadd.f32 %v636, %v640
        %v643 = vld [vmem:[#allocation10] sm:$0xff]
        %v644 = vld [vmem:[#allocation10 + $0x8] sm:$0xff]
        %v645 = vld [vmem:[#allocation10 + $0x10] sm:$0xff]
        %v646 = vld [vmem:[#allocation10 + $0x18] sm:$0xff]
        %v647 = vld [vmem:[#allocation10 + $0x20] sm:$0xff]
        %v648 = vld [vmem:[#allocation10 + $0x28] sm:$0xff]
        %v649 = vld [vmem:[#allocation10 + $0x30] sm:$0xff]
        %v650 = vld [vmem:[#allocation10 + $0x38] sm:$0xff]
        %v651 = vld [vmem:[#allocation10 + $0x40] sm:$0xff]
        %v652 = vld [vmem:[#allocation10 + $0x48] sm:$0xff]
        %v653 = vld [vmem:[#allocation10 + $0x50] sm:$0xff]
        %v654 = vld [vmem:[#allocation10 + $0x58] sm:$0xff]
        %v655 = vld [vmem:[#allocation10 + $0x60] sm:$0xff]
        %v656 = vld [vmem:[#allocation10 + $0x68] sm:$0xff]
        %v657 = vld [vmem:[#allocation10 + $0x70] sm:$0xff]
        %v658 = vld [vmem:[#allocation10 + $0x78] sm:$0xff]
        %v659 = vld [vmem:[%s7] sm:$0x1]
        %v661 = vlaneseq
        %v662 = vshrl.u32 %v661, 7
        %v663 = vsub.s32 0, %v662
        %v664 = vrot.slane %v659, %v663
        %666 = vmatprep.subr.mxu0 0.0
        %667 = vmatpush1.msra.mxu0 %v643
        %668 = vmatprep.subr.mxu0 0.0
        %669 = vmatpush1.msra.mxu0 %v644
        %670 = vmatprep.subr.mxu0 0.0
        %671 = vmatpush1.msra.mxu0 %v645
        %672 = vmatprep.subr.mxu0 0.0
        %673 = vmatpush1.msra.mxu0 %v646
        %674 = vmatprep.subr.mxu0 0.0
        %675 = vmatpush1.msra.mxu0 %v647
        %676 = vmatprep.subr.mxu0 0.0
        %677 = vmatpush1.msra.mxu0 %v648
        %678 = vmatprep.subr.mxu0 0.0
        %679 = vmatpush1.msra.mxu0 %v649
        %680 = vmatprep.subr.mxu0 0.0
        %681 = vmatpush1.msra.mxu0 %v650
        %682 = vmatprep.subr.mxu0 0.0
        %683 = vmatpush1.msra.mxu0 %v651
        %684 = vmatprep.subr.mxu0 0.0
        %685 = vmatpush1.msra.mxu0 %v652
        %686 = vmatprep.subr.mxu0 0.0
        %687 = vmatpush1.msra.mxu0 %v653
        %688 = vmatprep.subr.mxu0 0.0
        %689 = vmatpush1.msra.mxu0 %v654
        %690 = vmatprep.subr.mxu0 0.0
        %691 = vmatpush1.msra.mxu0 %v655
        %692 = vmatprep.subr.mxu0 0.0
        %693 = vmatpush1.msra.mxu0 %v656
        %694 = vmatprep.subr.mxu0 0.0
        %695 = vmatpush1.msra.mxu0 %v657
        %696 = vmatprep.subr.mxu0 0.0
        %697 = vmatpush1.msra.mxu0 %v658
        %698 = vmatprep.subr.mxu0 0.0
        %699 = vmatpush1.msra.mxu0 0.0
        %700 = vmatprep.subr.mxu0 0.0
        %701 = vmatpush1.msra.mxu0 0.0
        %702 = vmatprep.subr.mxu0 0.0
        %703 = vmatpush1.msra.mxu0 0.0
        %704 = vmatprep.subr.mxu0 0.0
        %705 = vmatpush1.msra.mxu0 0.0
        %706 = vmatprep.subr.mxu0 0.0
        %707 = vmatpush1.msra.mxu0 0.0
        %708 = vmatprep.subr.mxu0 0.0
        %709 = vmatpush1.msra.mxu0 0.0
        %710 = vmatprep.subr.mxu0 0.0
        %711 = vmatpush1.msra.mxu0 0.0
        %712 = vmatprep.subr.mxu0 0.0
        %713 = vmatpush1.msra.mxu0 0.0
        %714 = vmatprep.subr.mxu0 0.0
        %715 = vmatpush1.msra.mxu0 0.0
        %716 = vmatprep.subr.mxu0 0.0
        %717 = vmatpush1.msra.mxu0 0.0
        %718 = vmatprep.subr.mxu0 0.0
        %719 = vmatpush1.msra.mxu0 0.0
        %720 = vmatprep.subr.mxu0 0.0
        %721 = vmatpush1.msra.mxu0 0.0
        %722 = vmatprep.subr.mxu0 0.0
        %723 = vmatpush1.msra.mxu0 0.0
        %724 = vmatprep.subr.mxu0 0.0
        %725 = vmatpush1.msra.mxu0 0.0
        %726 = vmatprep.subr.mxu0 0.0
        %727 = vmatpush1.msra.mxu0 0.0
        %728 = vmatprep.subr.mxu0 0.0
        %729 = vmatpush1.msra.mxu0 0.0
        %730 = vmatprep.mubr.f32.mxu0 0.0
        %731 = vmatmul.mubr.f32.gmra.mrb[0].mxu0 %v641
        %v732 = vpop.f32.mrb[0].mxu0
        %v733 = vadd.f32 %v664, %v732
        %v734 = vpop.f32.mrb[0].mxu0
        %735 = vmatprep.mubr.f32.mxu0 0.0
        %736 = vmatmul.mubr.f32.gmra.mrb[0].mxu0 %v642
        %v737 = vpop.f32.mrb[0].mxu0
        %v738 = vadd.f32 %v664, %v737
        %v739 = vpop.f32.mrb[0].mxu0
        %740 = vdwg.mxu0
        %v741 = vmax.f32 %v733, 0.0
        %v742 = vmax.f32 %v738, 0.0
        %v743 = vld [vmem:[#allocation11] sm:$0xff]
        %v744 = vld [vmem:[#allocation11 + $0x8] sm:$0xff]
        %v745 = vld [vmem:[#allocation11 + $0x10] sm:$0xff]
        %v746 = vld [vmem:[#allocation11 + $0x18] sm:$0xff]
        %v747 = vld [vmem:[#allocation11 + $0x20] sm:$0xff]
        %v748 = vld [vmem:[#allocation11 + $0x28] sm:$0xff]
        %v749 = vld [vmem:[#allocation11 + $0x30] sm:$0xff]
        %v750 = vld [vmem:[#allocation11 + $0x38] sm:$0xff]
        %v751 = vld [vmem:[#allocation11 + $0x40] sm:$0xff]
        %v752 = vld [vmem:[#allocation11 + $0x48] sm:$0xff]
        %v753 = vld [vmem:[#allocation11 + $0x50] sm:$0xff]
        %v754 = vld [vmem:[#allocation11 + $0x58] sm:$0xff]
        %v755 = vld [vmem:[#allocation11 + $0x60] sm:$0xff]
        %v756 = vld [vmem:[#allocation11 + $0x68] sm:$0xff]
        %v757 = vld [vmem:[#allocation11 + $0x70] sm:$0xff]
        %v758 = vld [vmem:[#allocation11 + $0x78] sm:$0xff]
        %759 = vmatprep.subr.mxu0 0.0
        %760 = vmatpush1.msra.mxu0 %v743
        %761 = vmatprep.subr.mxu0 0.0
        %762 = vmatpush1.msra.mxu0 %v744
        %763 = vmatprep.subr.mxu0 0.0
        %764 = vmatpush1.msra.mxu0 %v745
        %765 = vmatprep.subr.mxu0 0.0
        %766 = vmatpush1.msra.mxu0 %v746
        %767 = vmatprep.subr.mxu0 0.0
        %768 = vmatpush1.msra.mxu0 %v747
        %769 = vmatprep.subr.mxu0 0.0
        %770 = vmatpush1.msra.mxu0 %v748
        %771 = vmatprep.subr.mxu0 0.0
        %772 = vmatpush1.msra.mxu0 %v749
        %773 = vmatprep.subr.mxu0 0.0
        %774 = vmatpush1.msra.mxu0 %v750
        %775 = vmatprep.subr.mxu0 0.0
        %776 = vmatpush1.msra.mxu0 %v751
        %777 = vmatprep.subr.mxu0 0.0
        %778 = vmatpush1.msra.mxu0 %v752
        %779 = vmatprep.subr.mxu0 0.0
        %780 = vmatpush1.msra.mxu0 %v753
        %781 = vmatprep.subr.mxu0 0.0
        %782 = vmatpush1.msra.mxu0 %v754
        %783 = vmatprep.subr.mxu0 0.0
        %784 = vmatpush1.msra.mxu0 %v755
        %785 = vmatprep.subr.mxu0 0.0
        %786 = vmatpush1.msra.mxu0 %v756
        %787 = vmatprep.subr.mxu0 0.0
        %788 = vmatpush1.msra.mxu0 %v757
        %789 = vmatprep.subr.mxu0 0.0
        %790 = vmatpush1.msra.mxu0 %v758
        %791 = vmatprep.subr.mxu0 0.0
        %792 = vmatpush1.msra.mxu0 0.0
        %793 = vmatprep.subr.mxu0 0.0
        %794 = vmatpush1.msra.mxu0 0.0
        %795 = vmatprep.subr.mxu0 0.0
        %796 = vmatpush1.msra.mxu0 0.0
        %797 = vmatprep.subr.mxu0 0.0
        %798 = vmatpush1.msra.mxu0 0.0
        %799 = vmatprep.subr.mxu0 0.0
        %800 = vmatpush1.msra.mxu0 0.0
        %801 = vmatprep.subr.mxu0 0.0
        %802 = vmatpush1.msra.mxu0 0.0
        %803 = vmatprep.subr.mxu0 0.0
        %804 = vmatpush1.msra.mxu0 0.0
        %805 = vmatprep.subr.mxu0 0.0
        %806 = vmatpush1.msra.mxu0 0.0
        %807 = vmatprep.subr.mxu0 0.0
        %808 = vmatpush1.msra.mxu0 0.0
        %809 = vmatprep.subr.mxu0 0.0
        %810 = vmatpush1.msra.mxu0 0.0
        %811 = vmatprep.subr.mxu0 0.0
        %812 = vmatpush1.msra.mxu0 0.0
        %813 = vmatprep.subr.mxu0 0.0
        %814 = vmatpush1.msra.mxu0 0.0
        %815 = vmatprep.subr.mxu0 0.0
        %816 = vmatpush1.msra.mxu0 0.0
        %817 = vmatprep.subr.mxu0 0.0
        %818 = vmatpush1.msra.mxu0 0.0
        %819 = vmatprep.subr.mxu0 0.0
        %820 = vmatpush1.msra.mxu0 0.0
        %821 = vmatprep.subr.mxu0 0.0
        %822 = vmatpush1.msra.mxu0 0.0
        %823 = vmatprep.mubr.f32.mxu0 0.0
        %824 = vmatmul.mubr.f32.gmra.mrb[0].mxu0 %v741
        %v825 = vpop.f32.mrb[0].mxu0
        %v826 = vadd.f32 0.0, %v825
        %v827 = vpop.f32.mrb[0].mxu0
        %828 = vmatprep.mubr.f32.mxu0 0.0
        %829 = vmatmul.mubr.f32.gmra.mrb[0].mxu0 %v742
        %v830 = vpop.f32.mrb[0].mxu0
        %v831 = vadd.f32 0.0, %v830
        %v832 = vpop.f32.mrb[0].mxu0
        %833 = vdwg.mxu0
        %834 = vst [vmem:[%s428] sm:$0xff] %v826
        %835 = vst [vmem:[%s428 + $0x8] sm:$0xff] %v831
        %s836 = sand.u32 %s227, 1
        %s837 = scalar_lea.sflag [#allocation6], %s836
        %s838 = sand.u32 %s227, 1
        %s839 = smul.addr %s838, 16
        %s840 = scalar_lea.vmem [#allocation13], %s839
        // Predicated region
        $region73: #{tpu_custom_call.1} parent=51 // pred_check
          %p841 = pneg %p237
        $region74: #{tpu_custom_call.1} parent=51 // pred_check_branch
          %843 = sbr.rel (%p841) target = $region76
        $region75: #{tpu_custom_call.1} parent=51 // pred_region
          %s844 = smul.u32 2, %s32
          %s846 = ssub.s32 256, 256
          %847 = vsyncadd %s837, %s846
          %s848 = smul.addr %s844, 128
          %s849 = scalar_lea.hbm %s9, %s848
          %s850 = sshll.u32 %s840, 4
          %s851 = int_to_ptr.vmem [resolvable:$true] %s850
          %856 = dma.vmem_to_hbm [thread:$0]  %s851, 256, %s849, %s837, 128, 128, 8
        $region76: #{tpu_custom_call.1} parent=51 // pred_fallthru
          _
      $region52: #{tpu_custom_call.1} parent=5 // pred_fallthru
        _
      %p857 = scmp.le.s32.totalorder 2, %s27
      // Predicated region
      $region77: #{tpu_custom_call.1} parent=5 // pred_check
        %p858 = pneg %p857
      $region78: #{tpu_custom_call.1} parent=5 // pred_check_branch
        %860 = sbr.rel (%p858) target = $region80
      $region79: #{tpu_custom_call.1} parent=5 // pred_region
        %s861 = ssub.s32 %s27, 2
        // Predicated region
        $region81: #{tpu_custom_call.1} parent=79 // pred_check
          %p862 = pneg %p243
        $region82: #{tpu_custom_call.1} parent=79 // pred_check_branch
          %864 = sbr.rel (%p862) target = $region84
        $region83: #{tpu_custom_call.1} parent=79 // pred_region
          %s865 = sand.u32 %s228, 1
          %s866 = scalar_lea.sflag [#allocation6], %s865
          %s867 = sand.u32 %s228, 1
          %s868 = smul.addr %s867, 16
          %s869 = scalar_lea.vmem [#allocation13], %s868
          %870 = dma.done %s866, 256
        $region84: #{tpu_custom_call.1} parent=79 // pred_fallthru
          _
      $region80: #{tpu_custom_call.1} parent=5 // pred_fallthru
        _
    $region6: #{tpu_custom_call.1} parent=1 // loop_footer
      %s31 = sadd.s32 1, %s27
    $region7: #{tpu_custom_call.1} parent=1 // loop_footer_branch
      %26 = sbr.rel target = $region3
    $region8: #{tpu_custom_call.1} parent=1 // loop_exit
      _
    %871 = vsyncpa [#allocation5], 1
    %s872 = scalar_lea.sflag [#allocation5], 1
    %873 = vsyncpa %s872, 1
    %874 = vsyncpa [#allocation8], 1
    %875 = vsyncpa [#allocation12], 1
    %876 = vsyncpa [#allocation6], 1
    %s877 = scalar_lea.sflag [#allocation6], 1
    %878 = vsyncpa %s877, 1

</llo_original>
